<compile_context>
chip_gen: v5e
topology: v5e:2x2
jax: 0.10.0
libtpu: 0.0.40
codegen_flags: <defaults>
</compile_context>

<pallas_src>
import jax
import jax.numpy as jnp
from jax.experimental import pallas as pl
from jax.experimental.pallas import tpu as pltpu


def _round_up(x, m):
    return ((x + m - 1) // m) * m


# -----------------------------------------------------------------------------
# Fused kernel: wavefront LSTM (n_layers) + per-step fused decoder heads.
# -----------------------------------------------------------------------------
def _make_regressor_kernel(n_layers, T, H, in_rows, wih_offs, whh_offs,
                           dec_off, dec_cols):
    G4 = 4 * H

    def kernel(xc_ref, w_ref, b_ref, s0_ref, preds_ref, state_ref):
        TB, d_in = xc_ref.shape          # time-major, flattened: (T*B_pad, Din)
        B = TB // T

        # ---- hoist all weight / bias loads out of the recurrence ------------
        wih = [w_ref[wih_offs[l]:wih_offs[l] + in_rows[l], 0:G4]
               for l in range(n_layers)]                       # bf16
        whh = [w_ref[whh_offs[l]:whh_offs[l] + H, 0:G4]
               for l in range(n_layers)]                       # bf16
        wdec = w_ref[dec_off:dec_off + H, 0:dec_cols]          # bf16 (heads + I_H)
        bias = [b_ref[l:l + 1, 0:G4] for l in range(n_layers)]   # f32 (1, 4H)
        bdec = b_ref[n_layers:n_layers + 1, 0:dec_cols]          # f32 (1, dec_cols)

        # ---- layer-0 input projection hoisted out of the recurrence ---------
        # One (T*B, Din) @ (Din, 4H) MXU matmul; per-step use is a free
        # sublane slice (rows t*B:(t+1)*B).  No transposes/stacks in-kernel.
        gx0 = jnp.dot(xc_ref[...], wih[0],
                      preferred_element_type=jnp.float32) + bias[0]   # (T*B, 4H) f32

        def cell(pre, h_prev, c_prev, whh_l):
            """One LSTM cell step; `pre` = input projection (+bias), f32 (B,4H)."""
            gates = pre + jnp.dot(h_prev.astype(jnp.bfloat16), whh_l,
                                  preferred_element_type=jnp.float32)
            # Full-width transcendentals: 2 EUP pushes instead of 4; the gate
            # slices below add ~one rotate of depth per step (i is at offset 0,
            # the f / g rotates sit on independent branches / XLU units).
            sg = jax.nn.sigmoid(gates)
            th = jnp.tanh(gates)
            i_g = sg[:, 0 * H:1 * H]
            f_g = sg[:, 1 * H:2 * H]
            g_g = th[:, 2 * H:3 * H]
            o_g = sg[:, 3 * H:4 * H]
            c_new = f_g * c_prev + i_g * g_g
            h_new = o_g * jnp.tanh(c_new)
            return h_new, c_new

        h = [s0_ref[l] for l in range(n_layers)]                # f32 (B, H)
        c = [s0_ref[n_layers + l] for l in range(n_layers)]

        # ---- wavefront recurrence: layer l step t issues as soon as layer
        # l-1 step t retires; critical path ~ T + L - 1 dependent cells. ------
        for t in range(T):                                      # fully unrolled
            for l in range(n_layers):
                if l == 0:
                    pre = gx0[t * B:(t + 1) * B, :]
                else:
                    # Per-step input projection of the layer below (computed on
                    # the wavefront slack, off layer l's own serial chain).
                    pre = jnp.dot(h[l - 1].astype(jnp.bfloat16), wih[l],
                                  preferred_element_type=jnp.float32) + bias[l]
                h[l], c[l] = cell(pre, h[l], c[l], whh[l])
                # TODO(synk): inter-layer dropout(0.3) (training only) not implemented.

            # Per-step fused decode: all heads + identity pass-through of the
            # hidden state -> one lane-dense (B, >=128) unmasked store, fully
            # off the recurrence chain (overlaps with later steps).
            dec_t = jnp.dot(h[n_layers - 1].astype(jnp.bfloat16), wdec,
                            preferred_element_type=jnp.float32) + bdec
            preds_ref[t] = dec_t

        for l in range(n_layers):
            state_ref[l] = h[l]
            state_ref[n_layers + l] = c[l]

    return kernel


# -----------------------------------------------------------------------------
# Full Regressor forward (wrapper: pack weights, pad batch, slice back)
# -----------------------------------------------------------------------------
def regressor_forward(params, x, inits, h0):
    """x: (B, T, in_dim), inits: list of (B, T, *), h0: (h, c) each (L, B, H)."""
    B, T, _ = x.shape
    xc = jnp.concatenate([x, *inits], axis=-1).astype(jnp.float32)    # (B, T, Din)
    h_all, c_all = h0
    L, _, H = h_all.shape
    G4 = 4 * H

    # Batch padding + time-major flatten + bf16 (tiny XLA-side relayout so the
    # kernel body stays free of transposes / stacks).
    B_pad = max(8, _round_up(B, 8))
    xc_tm = jnp.transpose(xc, (1, 0, 2))
    xc_tm = jnp.pad(xc_tm, ((0, 0), (0, B_pad - B), (0, 0)))
    xc_flat = xc_tm.reshape(T * B_pad, -1).astype(jnp.bfloat16)        # (T*B_pad, Din)

    state0 = jnp.concatenate([h_all, c_all], axis=0).astype(jnp.float32)  # (2L, B, H)
    state0 = jnp.pad(state0, ((0, 0), (0, B_pad - B), (0, 0)))

    # Fused decoder: all heads + an HxH identity block (hidden-state
    # pass-through), padded to a lane-dense >=128-wide output.
    out_dims = [int(dp["w_t"].shape[1]) for dp in params["dec"]]
    O_sum = sum(out_dims)
    dec_cols = max(128, _round_up(O_sum + H, 128))
    wdec = jnp.concatenate([dp["w_t"] for dp in params["dec"]]
                           + [jnp.eye(H, dtype=jnp.float32)], axis=1)   # (H, O_sum+H)
    bdec = jnp.concatenate([dp["b"] for dp in params["dec"]]
                           + [jnp.zeros((H,), jnp.float32)], axis=0)
    wdec = jnp.pad(wdec, ((0, 0), (0, dec_cols - (O_sum + H))))
    bdec = jnp.pad(bdec, (0, dec_cols - (O_sum + H)))

    # Pack every weight matrix into ONE bf16 array (single prologue DMA) and
    # every bias into one f32 array; kernel reconstructs views via static slices.
    C = max(G4, dec_cols)
    blocks, wih_offs, whh_offs, in_rows = [], [], [], []
    off = 0

    def add_block(w):
        nonlocal off
        r, cc = w.shape
        r_p = _round_up(r, 8)
        blocks.append(jnp.pad(w, ((0, r_p - r), (0, C - cc))))
        o = off
        off += r_p
        return o

    for lp in params["lstm"]:
        in_rows.append(int(lp["wih_t"].shape[0]))
        wih_offs.append(add_block(lp["wih_t"]))
        whh_offs.append(add_block(lp["whh_t"]))
    dec_off = add_block(wdec)
    w_all = jnp.concatenate(blocks, axis=0).astype(jnp.bfloat16)        # (R, C)

    b_rows = [jnp.pad(lp["b"], (0, C - G4)) for lp in params["lstm"]]
    b_rows.append(jnp.pad(bdec, (0, C - dec_cols)))
    b_all = jnp.stack(b_rows, axis=0).astype(jnp.float32)               # (L+1, C)

    kernel = _make_regressor_kernel(L, T, H, tuple(in_rows), tuple(wih_offs),
                                    tuple(whh_offs), dec_off, dec_cols)

    vmem = pl.BlockSpec(memory_space=pltpu.MemorySpace.VMEM)
    preds_tm, state = pl.pallas_call(
        kernel,
        out_shape=(jax.ShapeDtypeStruct((T, B_pad, dec_cols), jnp.float32),
                   jax.ShapeDtypeStruct((2 * L, B_pad, H), jnp.float32)),
        in_specs=[vmem, vmem, vmem, vmem],
        out_specs=(vmem, vmem),
    )(xc_flat, w_all, b_all, state0)

    # Slice back to the module's outputs (tiny XLA ops on the host-graph side).
    out_bf = jnp.transpose(preds_tm, (1, 0, 2))[:B]                     # (B, T, dec_cols)
    preds, offc = [], 0
    for od in out_dims:
        preds.append(out_bf[..., offc:offc + od])
        offc += od
    xc_out = out_bf[..., O_sum:O_sum + H]
    hN = (state[:L, :B, :], state[L:, :B, :])
    return preds, xc_out, hN


# -----------------------------------------------------------------------------
# Deterministic parameter construction (shapes per nn.LSTM / nn.Linear)
# -----------------------------------------------------------------------------
def make_params(key, in_dim, init_dim, hid_dim, out_dims, n_layers):
    params = {"lstm": [], "dec": []}
    din = in_dim + init_dim
    scale = 0.1
    for layer in range(n_layers):
        layer_in = din if layer == 0 else hid_dim
        key, k1, k2, k3, k4 = jax.random.split(key, 5)
        w_ih = scale * jax.random.normal(k1, (4 * hid_dim, layer_in), jnp.float32)
        w_hh = scale * jax.random.normal(k2, (4 * hid_dim, hid_dim), jnp.float32)
        b_ih = scale * jax.random.normal(k3, (4 * hid_dim,), jnp.float32)
        b_hh = scale * jax.random.normal(k4, (4 * hid_dim,), jnp.float32)
        params["lstm"].append({
            "wih_t": w_ih.T,              # (layer_in, 4H)
            "whh_t": w_hh.T,              # (H, 4H)
            "b": b_ih + b_hh,             # (4H,)
        })
    for out_dim in out_dims:
        key, k1, k2 = jax.random.split(key, 3)
        w = 0.01 * jax.random.normal(k1, (out_dim, hid_dim), jnp.float32)
        b = 0.01 * jax.random.normal(k2, (out_dim,), jnp.float32)
        params["dec"].append({"w_t": w.T, "b": b})
    return params


# -----------------------------------------------------------------------------
# Pure-JAX reference (f32 everywhere, for correctness check)
# -----------------------------------------------------------------------------
def reference_forward(params, x, inits, h0):
    xc = jnp.concatenate([x, *inits], axis=-1)
    xt = jnp.transpose(xc, (1, 0, 2))
    h_all, c_all = h0
    hT_list, cT_list = [], []
    inp = xt
    for layer_idx, lp in enumerate(params["lstm"]):
        H = lp["whh_t"].shape[0]

        def step(carry, x_t, lp=lp, H=H):
            h, c = carry
            gates = x_t @ lp["wih_t"] + h @ lp["whh_t"] + lp["b"]
            i = jax.nn.sigmoid(gates[:, 0 * H:1 * H])
            f = jax.nn.sigmoid(gates[:, 1 * H:2 * H])
            g = jnp.tanh(gates[:, 2 * H:3 * H])
            o = jax.nn.sigmoid(gates[:, 3 * H:4 * H])
            c_new = f * c + i * g
            h_new = o * jnp.tanh(c_new)
            return (h_new, c_new), h_new

        (hT, cT), hs = jax.lax.scan(step, (h_all[layer_idx], c_all[layer_idx]), inp)
        inp = hs
        hT_list.append(hT)
        cT_list.append(cT)
    xc_out = jnp.transpose(inp, (1, 0, 2))
    preds = [xc_out @ dp["w_t"] + dp["b"] for dp in params["dec"]]
    return preds, xc_out, (jnp.stack(hT_list), jnp.stack(cT_list))


if __name__ == "__main__":
    # Small shapes consistent with the module's forward.
    B, T = 2, 8
    in_dim, init_dim, hid_dim = 16, 16, 32
    out_dims = (8, 4)
    n_layers = 2

    key = jax.random.PRNGKey(0)
    key, kp, kx, ki, kh, kc = jax.random.split(key, 6)

    params = make_params(kp, in_dim, init_dim, hid_dim, out_dims, n_layers)

    x = jax.random.normal(kx, (B, T, in_dim), jnp.float32)
    inits = [jax.random.normal(ki, (B, T, init_dim), jnp.float32)]
    h0 = (jax.random.normal(kh, (n_layers, B, hid_dim), jnp.float32),
          jax.random.normal(kc, (n_layers, B, hid_dim), jnp.float32))

    fwd = jax.jit(regressor_forward)
    preds, xc_out, hN = fwd(params, x, inits, h0)
    jax.block_until_ready((preds, xc_out, hN))

    # Check against pure-JAX f32 reference.  The kernel uses bf16 MXU operands
    # with f32 accumulation (per perf review), so tolerance is loosened vs f32.
    preds_r, xc_r, hN_r = reference_forward(params, x, inits, h0)
    ATOL = 3e-2
    for p, pr in zip(preds, preds_r):
        assert jnp.allclose(p, pr, atol=ATOL), "pred mismatch"
    assert jnp.allclose(xc_out, xc_r, atol=ATOL), "xc mismatch"
    assert jnp.allclose(hN[0], hN_r[0], atol=ATOL), "hN mismatch"
    assert jnp.allclose(hN[1], hN_r[1], atol=ATOL), "cN mismatch"

    assert preds[0].shape == (B, T, out_dims[0])
    assert preds[1].shape == (B, T, out_dims[1])
    assert xc_out.shape == (B, T, hid_dim)
    assert hN[0].shape == (n_layers, B, hid_dim)
    assert hN[1].shape == (n_layers, B, hid_dim)

    print("KERNEL_OK")
</pallas_src>

<mosaic_0001>
module attributes {stable_mosaic.version = 11 : i64} {
  func.func @kernel(%arg0: memref<64x32xbf16, #tpu.memory_space<vmem>>, %arg1: memref<160x128xbf16, #tpu.memory_space<vmem>>, %arg2: memref<3x128xf32, #tpu.memory_space<vmem>>, %arg3: memref<4x8x32xf32, #tpu.memory_space<vmem>>, %arg4: memref<8x8x128xf32, #tpu.memory_space<vmem>>, %arg5: memref<4x8x32xf32, #tpu.memory_space<vmem>>) attributes {dimension_semantics = [], scalar_prefetch = 0 : i64, scratch_operands = 0 : i64, tpu.core_type = #tpu.core_type<tc>} {
    %c0 = arith.constant 0 : index
    %c0_0 = arith.constant 0 : index
    %0 = vector.load %arg1[%c0, %c0_0] : memref<160x128xbf16, #tpu.memory_space<vmem>>, vector<32x128xbf16>
    %c64 = arith.constant 64 : index
    %c0_1 = arith.constant 0 : index
    %1 = vector.load %arg1[%c64, %c0_1] : memref<160x128xbf16, #tpu.memory_space<vmem>>, vector<32x128xbf16>
    %c32 = arith.constant 32 : index
    %c0_2 = arith.constant 0 : index
    %2 = vector.load %arg1[%c32, %c0_2] : memref<160x128xbf16, #tpu.memory_space<vmem>>, vector<32x128xbf16>
    %c96 = arith.constant 96 : index
    %c0_3 = arith.constant 0 : index
    %3 = vector.load %arg1[%c96, %c0_3] : memref<160x128xbf16, #tpu.memory_space<vmem>>, vector<32x128xbf16>
    %c128 = arith.constant 128 : index
    %c0_4 = arith.constant 0 : index
    %4 = vector.load %arg1[%c128, %c0_4] : memref<160x128xbf16, #tpu.memory_space<vmem>>, vector<32x128xbf16>
    %c0_5 = arith.constant 0 : index
    %c0_6 = arith.constant 0 : index
    %5 = vector.load %arg2[%c0_5, %c0_6] : memref<3x128xf32, #tpu.memory_space<vmem>>, vector<1x128xf32>
    %c1 = arith.constant 1 : index
    %c0_7 = arith.constant 0 : index
    %6 = vector.load %arg2[%c1, %c0_7] : memref<3x128xf32, #tpu.memory_space<vmem>>, vector<1x128xf32>
    %c2 = arith.constant 2 : index
    %c0_8 = arith.constant 0 : index
    %7 = vector.load %arg2[%c2, %c0_8] : memref<3x128xf32, #tpu.memory_space<vmem>>, vector<1x128xf32>
    %c0_9 = arith.constant 0 : index
    %c0_10 = arith.constant 0 : index
    %8 = vector.load %arg0[%c0_9, %c0_10] : memref<64x32xbf16, #tpu.memory_space<vmem>>, vector<64x32xbf16>
    %cst = arith.constant dense<0.000000e+00> : vector<64x128xf32>
    %9 = tpu.matmul %8, %0, %cst {dimension_numbers = #tpu.dot_dimension_numbers<[1], [0], [0], [1], [0, 0, 1, 1], [], []>} : vector<64x32xbf16>, vector<32x128xbf16>, vector<64x128xf32> -> vector<64x128xf32>
    %10 = vector.broadcast %5 : vector<1x128xf32> to vector<64x128xf32>
    %11 = arith.addf %9, %10 : vector<64x128xf32>
    %c0_11 = arith.constant 0 : index
    %c0_12 = arith.constant 0 : index
    %c0_13 = arith.constant 0 : index
    %12 = vector.load %arg3[%c0_11, %c0_12, %c0_13] : memref<4x8x32xf32, #tpu.memory_space<vmem>>, vector<1x8x32xf32>
    %13 = vector.shape_cast %12 : vector<1x8x32xf32> to vector<8x32xf32>
    %c1_14 = arith.constant 1 : index
    %c0_15 = arith.constant 0 : index
    %c0_16 = arith.constant 0 : index
    %14 = vector.load %arg3[%c1_14, %c0_15, %c0_16] : memref<4x8x32xf32, #tpu.memory_space<vmem>>, vector<1x8x32xf32>
    %15 = vector.shape_cast %14 : vector<1x8x32xf32> to vector<8x32xf32>
    %c2_17 = arith.constant 2 : index
    %c0_18 = arith.constant 0 : index
    %c0_19 = arith.constant 0 : index
    %16 = vector.load %arg3[%c2_17, %c0_18, %c0_19] : memref<4x8x32xf32, #tpu.memory_space<vmem>>, vector<1x8x32xf32>
    %17 = vector.shape_cast %16 : vector<1x8x32xf32> to vector<8x32xf32>
    %c3 = arith.constant 3 : index
    %c0_20 = arith.constant 0 : index
    %c0_21 = arith.constant 0 : index
    %18 = vector.load %arg3[%c3, %c0_20, %c0_21] : memref<4x8x32xf32, #tpu.memory_space<vmem>>, vector<1x8x32xf32>
    %19 = vector.shape_cast %18 : vector<1x8x32xf32> to vector<8x32xf32>
    %20 = vector.extract_strided_slice %11 {offsets = [0, 0], sizes = [8, 128], strides = [1, 1]} : vector<64x128xf32> to vector<8x128xf32>
    %21 = arith.truncf %13 : vector<8x32xf32> to vector<8x32xbf16>
    %cst_22 = arith.constant dense<0.000000e+00> : vector<8x128xf32>
    %22 = tpu.matmul %21, %2, %cst_22 {dimension_numbers = #tpu.dot_dimension_numbers<[1], [0], [0], [1], [0, 0, 1, 1], [], []>} : vector<8x32xbf16>, vector<32x128xbf16>, vector<8x128xf32> -> vector<8x128xf32>
    %23 = arith.addf %20, %22 : vector<8x128xf32>
    %24 = arith.negf %23 : vector<8x128xf32>
    %25 = math.exp %24 : vector<8x128xf32>
    %cst_23 = arith.constant 1.000000e+00 : f32
    %26 = vector.broadcast %cst_23 : f32 to vector<8x128xf32>
    %27 = arith.addf %26, %25 : vector<8x128xf32>
    %28 = arith.divf %26, %27 : vector<8x128xf32>
    %29 = math.tanh %23 : vector<8x128xf32>
    %30 = vector.extract_strided_slice %28 {offsets = [0, 0], sizes = [8, 32], strides = [1, 1]} : vector<8x128xf32> to vector<8x32xf32>
    %31 = vector.extract_strided_slice %28 {offsets = [0, 32], sizes = [8, 32], strides = [1, 1]} : vector<8x128xf32> to vector<8x32xf32>
    %32 = vector.extract_strided_slice %29 {offsets = [0, 64], sizes = [8, 32], strides = [1, 1]} : vector<8x128xf32> to vector<8x32xf32>
    %33 = vector.extract_strided_slice %28 {offsets = [0, 96], sizes = [8, 32], strides = [1, 1]} : vector<8x128xf32> to vector<8x32xf32>
    %34 = arith.mulf %31, %17 : vector<8x32xf32>
    %35 = arith.mulf %30, %32 : vector<8x32xf32>
    %36 = arith.addf %34, %35 : vector<8x32xf32>
    %37 = math.tanh %36 : vector<8x32xf32>
    %38 = arith.mulf %33, %37 : vector<8x32xf32>
    %39 = arith.truncf %38 : vector<8x32xf32> to vector<8x32xbf16>
    %cst_24 = arith.constant dense<0.000000e+00> : vector<8x128xf32>
    %40 = tpu.matmul %39, %1, %cst_24 {dimension_numbers = #tpu.dot_dimension_numbers<[1], [0], [0], [1], [0, 0, 1, 1], [], []>} : vector<8x32xbf16>, vector<32x128xbf16>, vector<8x128xf32> -> vector<8x128xf32>
    %41 = vector.broadcast %6 : vector<1x128xf32> to vector<8x128xf32>
    %42 = arith.addf %40, %41 : vector<8x128xf32>
    %43 = arith.truncf %15 : vector<8x32xf32> to vector<8x32xbf16>
    %cst_25 = arith.constant dense<0.000000e+00> : vector<8x128xf32>
    %44 = tpu.matmul %43, %3, %cst_25 {dimension_numbers = #tpu.dot_dimension_numbers<[1], [0], [0], [1], [0, 0, 1, 1], [], []>} : vector<8x32xbf16>, vector<32x128xbf16>, vector<8x128xf32> -> vector<8x128xf32>
    %45 = arith.addf %42, %44 : vector<8x128xf32>
    %46 = arith.negf %45 : vector<8x128xf32>
    %47 = math.exp %46 : vector<8x128xf32>
    %cst_26 = arith.constant 1.000000e+00 : f32
    %48 = vector.broadcast %cst_26 : f32 to vector<8x128xf32>
    %49 = arith.addf %48, %47 : vector<8x128xf32>
    %50 = arith.divf %48, %49 : vector<8x128xf32>
    %51 = math.tanh %45 : vector<8x128xf32>
    %52 = vector.extract_strided_slice %50 {offsets = [0, 0], sizes = [8, 32], strides = [1, 1]} : vector<8x128xf32> to vector<8x32xf32>
    %53 = vector.extract_strided_slice %50 {offsets = [0, 32], sizes = [8, 32], strides = [1, 1]} : vector<8x128xf32> to vector<8x32xf32>
    %54 = vector.extract_strided_slice %51 {offsets = [0, 64], sizes = [8, 32], strides = [1, 1]} : vector<8x128xf32> to vector<8x32xf32>
    %55 = vector.extract_strided_slice %50 {offsets = [0, 96], sizes = [8, 32], strides = [1, 1]} : vector<8x128xf32> to vector<8x32xf32>
    %56 = arith.mulf %53, %19 : vector<8x32xf32>
    %57 = arith.mulf %52, %54 : vector<8x32xf32>
    %58 = arith.addf %56, %57 : vector<8x32xf32>
    %59 = math.tanh %58 : vector<8x32xf32>
    %60 = arith.mulf %55, %59 : vector<8x32xf32>
    %61 = arith.truncf %60 : vector<8x32xf32> to vector<8x32xbf16>
    %cst_27 = arith.constant dense<0.000000e+00> : vector<8x128xf32>
    %62 = tpu.matmul %61, %4, %cst_27 {dimension_numbers = #tpu.dot_dimension_numbers<[1], [0], [0], [1], [0, 0, 1, 1], [], []>} : vector<8x32xbf16>, vector<32x128xbf16>, vector<8x128xf32> -> vector<8x128xf32>
    %63 = vector.broadcast %7 : vector<1x128xf32> to vector<8x128xf32>
    %64 = arith.addf %62, %63 : vector<8x128xf32>
    %c0_28 = arith.constant 0 : index
    %c0_29 = arith.constant 0 : index
    %c0_30 = arith.constant 0 : index
    %65 = vector.load %arg4[%c0_28, %c0_29, %c0_30] : memref<8x8x128xf32, #tpu.memory_space<vmem>>, vector<1x8x128xf32>
    %66 = vector.shape_cast %65 : vector<1x8x128xf32> to vector<8x128xf32>
    %67 = vector.shape_cast %64 : vector<8x128xf32> to vector<1x8x128xf32>
    tpu.vector_store %arg4[%c0_28, %c0_29, %c0_30], %67 {strides = array<i32>} : memref<8x8x128xf32, #tpu.memory_space<vmem>>, vector<1x8x128xf32>,
    %68 = vector.extract_strided_slice %11 {offsets = [8, 0], sizes = [8, 128], strides = [1, 1]} : vector<64x128xf32> to vector<8x128xf32>
    %69 = arith.truncf %38 : vector<8x32xf32> to vector<8x32xbf16>
    %cst_31 = arith.constant dense<0.000000e+00> : vector<8x128xf32>
    %70 = tpu.matmul %69, %2, %cst_31 {dimension_numbers = #tpu.dot_dimension_numbers<[1], [0], [0], [1], [0, 0, 1, 1], [], []>} : vector<8x32xbf16>, vector<32x128xbf16>, vector<8x128xf32> -> vector<8x128xf32>
    %71 = arith.addf %68, %70 : vector<8x128xf32>
    %72 = arith.negf %71 : vector<8x128xf32>
    %73 = math.exp %72 : vector<8x128xf32>
    %cst_32 = arith.constant 1.000000e+00 : f32
    %74 = vector.broadcast %cst_32 : f32 to vector<8x128xf32>
    %75 = arith.addf %74, %73 : vector<8x128xf32>
    %76 = arith.divf %74, %75 : vector<8x128xf32>
    %77 = math.tanh %71 : vector<8x128xf32>
    %78 = vector.extract_strided_slice %76 {offsets = [0, 0], sizes = [8, 32], strides = [1, 1]} : vector<8x128xf32> to vector<8x32xf32>
    %79 = vector.extract_strided_slice %76 {offsets = [0, 32], sizes = [8, 32], strides = [1, 1]} : vector<8x128xf32> to vector<8x32xf32>
    %80 = vector.extract_strided_slice %77 {offsets = [0, 64], sizes = [8, 32], strides = [1, 1]} : vector<8x128xf32> to vector<8x32xf32>
    %81 = vector.extract_strided_slice %76 {offsets = [0, 96], sizes = [8, 32], strides = [1, 1]} : vector<8x128xf32> to vector<8x32xf32>
    %82 = arith.mulf %79, %36 : vector<8x32xf32>
    %83 = arith.mulf %78, %80 : vector<8x32xf32>
    %84 = arith.addf %82, %83 : vector<8x32xf32>
    %85 = math.tanh %84 : vector<8x32xf32>
    %86 = arith.mulf %81, %85 : vector<8x32xf32>
    %87 = arith.truncf %86 : vector<8x32xf32> to vector<8x32xbf16>
    %cst_33 = arith.constant dense<0.000000e+00> : vector<8x128xf32>
    %88 = tpu.matmul %87, %1, %cst_33 {dimension_numbers = #tpu.dot_dimension_numbers<[1], [0], [0], [1], [0, 0, 1, 1], [], []>} : vector<8x32xbf16>, vector<32x128xbf16>, vector<8x128xf32> -> vector<8x128xf32>
    %89 = vector.broadcast %6 : vector<1x128xf32> to vector<8x128xf32>
    %90 = arith.addf %88, %89 : vector<8x128xf32>
    %91 = arith.truncf %60 : vector<8x32xf32> to vector<8x32xbf16>
    %cst_34 = arith.constant dense<0.000000e+00> : vector<8x128xf32>
    %92 = tpu.matmul %91, %3, %cst_34 {dimension_numbers = #tpu.dot_dimension_numbers<[1], [0], [0], [1], [0, 0, 1, 1], [], []>} : vector<8x32xbf16>, vector<32x128xbf16>, vector<8x128xf32> -> vector<8x128xf32>
    %93 = arith.addf %90, %92 : vector<8x128xf32>
    %94 = arith.negf %93 : vector<8x128xf32>
    %95 = math.exp %94 : vector<8x128xf32>
    %cst_35 = arith.constant 1.000000e+00 : f32
    %96 = vector.broadcast %cst_35 : f32 to vector<8x128xf32>
    %97 = arith.addf %96, %95 : vector<8x128xf32>
    %98 = arith.divf %96, %97 : vector<8x128xf32>
    %99 = math.tanh %93 : vector<8x128xf32>
    %100 = vector.extract_strided_slice %98 {offsets = [0, 0], sizes = [8, 32], strides = [1, 1]} : vector<8x128xf32> to vector<8x32xf32>
    %101 = vector.extract_strided_slice %98 {offsets = [0, 32], sizes = [8, 32], strides = [1, 1]} : vector<8x128xf32> to vector<8x32xf32>
    %102 = vector.extract_strided_slice %99 {offsets = [0, 64], sizes = [8, 32], strides = [1, 1]} : vector<8x128xf32> to vector<8x32xf32>
    %103 = vector.extract_strided_slice %98 {offsets = [0, 96], sizes = [8, 32], strides = [1, 1]} : vector<8x128xf32> to vector<8x32xf32>
    %104 = arith.mulf %101, %58 : vector<8x32xf32>
    %105 = arith.mulf %100, %102 : vector<8x32xf32>
    %106 = arith.addf %104, %105 : vector<8x32xf32>
    %107 = math.tanh %106 : vector<8x32xf32>
    %108 = arith.mulf %103, %107 : vector<8x32xf32>
    %109 = arith.truncf %108 : vector<8x32xf32> to vector<8x32xbf16>
    %cst_36 = arith.constant dense<0.000000e+00> : vector<8x128xf32>
    %110 = tpu.matmul %109, %4, %cst_36 {dimension_numbers = #tpu.dot_dimension_numbers<[1], [0], [0], [1], [0, 0, 1, 1], [], []>} : vector<8x32xbf16>, vector<32x128xbf16>, vector<8x128xf32> -> vector<8x128xf32>
    %111 = vector.broadcast %7 : vector<1x128xf32> to vector<8x128xf32>
    %112 = arith.addf %110, %111 : vector<8x128xf32>
    %c1_37 = arith.constant 1 : index
    %c0_38 = arith.constant 0 : index
    %c0_39 = arith.constant 0 : index
    %113 = vector.load %arg4[%c1_37, %c0_38, %c0_39] : memref<8x8x128xf32, #tpu.memory_space<vmem>>, vector<1x8x128xf32>
    %114 = vector.shape_cast %113 : vector<1x8x128xf32> to vector<8x128xf32>
    %115 = vector.shape_cast %112 : vector<8x128xf32> to vector<1x8x128xf32>
    tpu.vector_store %arg4[%c1_37, %c0_38, %c0_39], %115 {strides = array<i32>} : memref<8x8x128xf32, #tpu.memory_space<vmem>>, vector<1x8x128xf32>,
    %116 = vector.extract_strided_slice %11 {offsets = [16, 0], sizes = [8, 128], strides = [1, 1]} : vector<64x128xf32> to vector<8x128xf32>
    %117 = arith.truncf %86 : vector<8x32xf32> to vector<8x32xbf16>
    %cst_40 = arith.constant dense<0.000000e+00> : vector<8x128xf32>
    %118 = tpu.matmul %117, %2, %cst_40 {dimension_numbers = #tpu.dot_dimension_numbers<[1], [0], [0], [1], [0, 0, 1, 1], [], []>} : vector<8x32xbf16>, vector<32x128xbf16>, vector<8x128xf32> -> vector<8x128xf32>
    %119 = arith.addf %116, %118 : vector<8x128xf32>
    %120 = arith.negf %119 : vector<8x128xf32>
    %121 = math.exp %120 : vector<8x128xf32>
    %cst_41 = arith.constant 1.000000e+00 : f32
    %122 = vector.broadcast %cst_41 : f32 to vector<8x128xf32>
    %123 = arith.addf %122, %121 : vector<8x128xf32>
    %124 = arith.divf %122, %123 : vector<8x128xf32>
    %125 = math.tanh %119 : vector<8x128xf32>
    %126 = vector.extract_strided_slice %124 {offsets = [0, 0], sizes = [8, 32], strides = [1, 1]} : vector<8x128xf32> to vector<8x32xf32>
    %127 = vector.extract_strided_slice %124 {offsets = [0, 32], sizes = [8, 32], strides = [1, 1]} : vector<8x128xf32> to vector<8x32xf32>
    %128 = vector.extract_strided_slice %125 {offsets = [0, 64], sizes = [8, 32], strides = [1, 1]} : vector<8x128xf32> to vector<8x32xf32>
    %129 = vector.extract_strided_slice %124 {offsets = [0, 96], sizes = [8, 32], strides = [1, 1]} : vector<8x128xf32> to vector<8x32xf32>
    %130 = arith.mulf %127, %84 : vector<8x32xf32>
    %131 = arith.mulf %126, %128 : vector<8x32xf32>
    %132 = arith.addf %130, %131 : vector<8x32xf32>
    %133 = math.tanh %132 : vector<8x32xf32>
    %134 = arith.mulf %129, %133 : vector<8x32xf32>
    %135 = arith.truncf %134 : vector<8x32xf32> to vector<8x32xbf16>
    %cst_42 = arith.constant dense<0.000000e+00> : vector<8x128xf32>
    %136 = tpu.matmul %135, %1, %cst_42 {dimension_numbers = #tpu.dot_dimension_numbers<[1], [0], [0], [1], [0, 0, 1, 1], [], []>} : vector<8x32xbf16>, vector<32x128xbf16>, vector<8x128xf32> -> vector<8x128xf32>
    %137 = vector.broadcast %6 : vector<1x128xf32> to vector<8x128xf32>
    %138 = arith.addf %136, %137 : vector<8x128xf32>
    %139 = arith.truncf %108 : vector<8x32xf32> to vector<8x32xbf16>
    %cst_43 = arith.constant dense<0.000000e+00> : vector<8x128xf32>
    %140 = tpu.matmul %139, %3, %cst_43 {dimension_numbers = #tpu.dot_dimension_numbers<[1], [0], [0], [1], [0, 0, 1, 1], [], []>} : vector<8x32xbf16>, vector<32x128xbf16>, vector<8x128xf32> -> vector<8x128xf32>
    %141 = arith.addf %138, %140 : vector<8x128xf32>
    %142 = arith.negf %141 : vector<8x128xf32>
    %143 = math.exp %142 : vector<8x128xf32>
    %cst_44 = arith.constant 1.000000e+00 : f32
    %144 = vector.broadcast %cst_44 : f32 to vector<8x128xf32>
    %145 = arith.addf %144, %143 : vector<8x128xf32>
    %146 = arith.divf %144, %145 : vector<8x128xf32>
    %147 = math.tanh %141 : vector<8x128xf32>
    %148 = vector.extract_strided_slice %146 {offsets = [0, 0], sizes = [8, 32], strides = [1, 1]} : vector<8x128xf32> to vector<8x32xf32>
    %149 = vector.extract_strided_slice %146 {offsets = [0, 32], sizes = [8, 32], strides = [1, 1]} : vector<8x128xf32> to vector<8x32xf32>
    %150 = vector.extract_strided_slice %147 {offsets = [0, 64], sizes = [8, 32], strides = [1, 1]} : vector<8x128xf32> to vector<8x32xf32>
    %151 = vector.extract_strided_slice %146 {offsets = [0, 96], sizes = [8, 32], strides = [1, 1]} : vector<8x128xf32> to vector<8x32xf32>
    %152 = arith.mulf %149, %106 : vector<8x32xf32>
    %153 = arith.mulf %148, %150 : vector<8x32xf32>
    %154 = arith.addf %152, %153 : vector<8x32xf32>
    %155 = math.tanh %154 : vector<8x32xf32>
    %156 = arith.mulf %151, %155 : vector<8x32xf32>
    %157 = arith.truncf %156 : vector<8x32xf32> to vector<8x32xbf16>
    %cst_45 = arith.constant dense<0.000000e+00> : vector<8x128xf32>
    %158 = tpu.matmul %157, %4, %cst_45 {dimension_numbers = #tpu.dot_dimension_numbers<[1], [0], [0], [1], [0, 0, 1, 1], [], []>} : vector<8x32xbf16>, vector<32x128xbf16>, vector<8x128xf32> -> vector<8x128xf32>
    %159 = vector.broadcast %7 : vector<1x128xf32> to vector<8x128xf32>
    %160 = arith.addf %158, %159 : vector<8x128xf32>
    %c2_46 = arith.constant 2 : index
    %c0_47 = arith.constant 0 : index
    %c0_48 = arith.constant 0 : index
    %161 = vector.load %arg4[%c2_46, %c0_47, %c0_48] : memref<8x8x128xf32, #tpu.memory_space<vmem>>, vector<1x8x128xf32>
    %162 = vector.shape_cast %161 : vector<1x8x128xf32> to vector<8x128xf32>
    %163 = vector.shape_cast %160 : vector<8x128xf32> to vector<1x8x128xf32>
    tpu.vector_store %arg4[%c2_46, %c0_47, %c0_48], %163 {strides = array<i32>} : memref<8x8x128xf32, #tpu.memory_space<vmem>>, vector<1x8x128xf32>,
    %164 = vector.extract_strided_slice %11 {offsets = [24, 0], sizes = [8, 128], strides = [1, 1]} : vector<64x128xf32> to vector<8x128xf32>
    %165 = arith.truncf %134 : vector<8x32xf32> to vector<8x32xbf16>
    %cst_49 = arith.constant dense<0.000000e+00> : vector<8x128xf32>
    %166 = tpu.matmul %165, %2, %cst_49 {dimension_numbers = #tpu.dot_dimension_numbers<[1], [0], [0], [1], [0, 0, 1, 1], [], []>} : vector<8x32xbf16>, vector<32x128xbf16>, vector<8x128xf32> -> vector<8x128xf32>
    %167 = arith.addf %164, %166 : vector<8x128xf32>
    %168 = arith.negf %167 : vector<8x128xf32>
    %169 = math.exp %168 : vector<8x128xf32>
    %cst_50 = arith.constant 1.000000e+00 : f32
    %170 = vector.broadcast %cst_50 : f32 to vector<8x128xf32>
    %171 = arith.addf %170, %169 : vector<8x128xf32>
    %172 = arith.divf %170, %171 : vector<8x128xf32>
    %173 = math.tanh %167 : vector<8x128xf32>
    %174 = vector.extract_strided_slice %172 {offsets = [0, 0], sizes = [8, 32], strides = [1, 1]} : vector<8x128xf32> to vector<8x32xf32>
    %175 = vector.extract_strided_slice %172 {offsets = [0, 32], sizes = [8, 32], strides = [1, 1]} : vector<8x128xf32> to vector<8x32xf32>
    %176 = vector.extract_strided_slice %173 {offsets = [0, 64], sizes = [8, 32], strides = [1, 1]} : vector<8x128xf32> to vector<8x32xf32>
    %177 = vector.extract_strided_slice %172 {offsets = [0, 96], sizes = [8, 32], strides = [1, 1]} : vector<8x128xf32> to vector<8x32xf32>
    %178 = arith.mulf %175, %132 : vector<8x32xf32>
    %179 = arith.mulf %174, %176 : vector<8x32xf32>
    %180 = arith.addf %178, %179 : vector<8x32xf32>
    %181 = math.tanh %180 : vector<8x32xf32>
    %182 = arith.mulf %177, %181 : vector<8x32xf32>
    %183 = arith.truncf %182 : vector<8x32xf32> to vector<8x32xbf16>
    %cst_51 = arith.constant dense<0.000000e+00> : vector<8x128xf32>
    %184 = tpu.matmul %183, %1, %cst_51 {dimension_numbers = #tpu.dot_dimension_numbers<[1], [0], [0], [1], [0, 0, 1, 1], [], []>} : vector<8x32xbf16>, vector<32x128xbf16>, vector<8x128xf32> -> vector<8x128xf32>
    %185 = vector.broadcast %6 : vector<1x128xf32> to vector<8x128xf32>
    %186 = arith.addf %184, %185 : vector<8x128xf32>
    %187 = arith.truncf %156 : vector<8x32xf32> to vector<8x32xbf16>
    %cst_52 = arith.constant dense<0.000000e+00> : vector<8x128xf32>
    %188 = tpu.matmul %187, %3, %cst_52 {dimension_numbers = #tpu.dot_dimension_numbers<[1], [0], [0], [1], [0, 0, 1, 1], [], []>} : vector<8x32xbf16>, vector<32x128xbf16>, vector<8x128xf32> -> vector<8x128xf32>
    %189 = arith.addf %186, %188 : vector<8x128xf32>
    %190 = arith.negf %189 : vector<8x128xf32>
    %191 = math.exp %190 : vector<8x128xf32>
    %cst_53 = arith.constant 1.000000e+00 : f32
    %192 = vector.broadcast %cst_53 : f32 to vector<8x128xf32>
    %193 = arith.addf %192, %191 : vector<8x128xf32>
    %194 = arith.divf %192, %193 : vector<8x128xf32>
    %195 = math.tanh %189 : vector<8x128xf32>
    %196 = vector.extract_strided_slice %194 {offsets = [0, 0], sizes = [8, 32], strides = [1, 1]} : vector<8x128xf32> to vector<8x32xf32>
    %197 = vector.extract_strided_slice %194 {offsets = [0, 32], sizes = [8, 32], strides = [1, 1]} : vector<8x128xf32> to vector<8x32xf32>
    %198 = vector.extract_strided_slice %195 {offsets = [0, 64], sizes = [8, 32], strides = [1, 1]} : vector<8x128xf32> to vector<8x32xf32>
    %199 = vector.extract_strided_slice %194 {offsets = [0, 96], sizes = [8, 32], strides = [1, 1]} : vector<8x128xf32> to vector<8x32xf32>
    %200 = arith.mulf %197, %154 : vector<8x32xf32>
    %201 = arith.mulf %196, %198 : vector<8x32xf32>
    %202 = arith.addf %200, %201 : vector<8x32xf32>
    %203 = math.tanh %202 : vector<8x32xf32>
    %204 = arith.mulf %199, %203 : vector<8x32xf32>
    %205 = arith.truncf %204 : vector<8x32xf32> to vector<8x32xbf16>
    %cst_54 = arith.constant dense<0.000000e+00> : vector<8x128xf32>
    %206 = tpu.matmul %205, %4, %cst_54 {dimension_numbers = #tpu.dot_dimension_numbers<[1], [0], [0], [1], [0, 0, 1, 1], [], []>} : vector<8x32xbf16>, vector<32x128xbf16>, vector<8x128xf32> -> vector<8x128xf32>
    %207 = vector.broadcast %7 : vector<1x128xf32> to vector<8x128xf32>
    %208 = arith.addf %206, %207 : vector<8x128xf32>
    %c3_55 = arith.constant 3 : index
    %c0_56 = arith.constant 0 : index
    %c0_57 = arith.constant 0 : index
    %209 = vector.load %arg4[%c3_55, %c0_56, %c0_57] : memref<8x8x128xf32, #tpu.memory_space<vmem>>, vector<1x8x128xf32>
    %210 = vector.shape_cast %209 : vector<1x8x128xf32> to vector<8x128xf32>
    %211 = vector.shape_cast %208 : vector<8x128xf32> to vector<1x8x128xf32>
    tpu.vector_store %arg4[%c3_55, %c0_56, %c0_57], %211 {strides = array<i32>} : memref<8x8x128xf32, #tpu.memory_space<vmem>>, vector<1x8x128xf32>,
    %212 = vector.extract_strided_slice %11 {offsets = [32, 0], sizes = [8, 128], strides = [1, 1]} : vector<64x128xf32> to vector<8x128xf32>
    %213 = arith.truncf %182 : vector<8x32xf32> to vector<8x32xbf16>
    %cst_58 = arith.constant dense<0.000000e+00> : vector<8x128xf32>
    %214 = tpu.matmul %213, %2, %cst_58 {dimension_numbers = #tpu.dot_dimension_numbers<[1], [0], [0], [1], [0, 0, 1, 1], [], []>} : vector<8x32xbf16>, vector<32x128xbf16>, vector<8x128xf32> -> vector<8x128xf32>
    %215 = arith.addf %212, %214 : vector<8x128xf32>
    %216 = arith.negf %215 : vector<8x128xf32>
    %217 = math.exp %216 : vector<8x128xf32>
    %cst_59 = arith.constant 1.000000e+00 : f32
    %218 = vector.broadcast %cst_59 : f32 to vector<8x128xf32>
    %219 = arith.addf %218, %217 : vector<8x128xf32>
    %220 = arith.divf %218, %219 : vector<8x128xf32>
    %221 = math.tanh %215 : vector<8x128xf32>
    %222 = vector.extract_strided_slice %220 {offsets = [0, 0], sizes = [8, 32], strides = [1, 1]} : vector<8x128xf32> to vector<8x32xf32>
    %223 = vector.extract_strided_slice %220 {offsets = [0, 32], sizes = [8, 32], strides = [1, 1]} : vector<8x128xf32> to vector<8x32xf32>
    %224 = vector.extract_strided_slice %221 {offsets = [0, 64], sizes = [8, 32], strides = [1, 1]} : vector<8x128xf32> to vector<8x32xf32>
    %225 = vector.extract_strided_slice %220 {offsets = [0, 96], sizes = [8, 32], strides = [1, 1]} : vector<8x128xf32> to vector<8x32xf32>
    %226 = arith.mulf %223, %180 : vector<8x32xf32>
    %227 = arith.mulf %222, %224 : vector<8x32xf32>
    %228 = arith.addf %226, %227 : vector<8x32xf32>
    %229 = math.tanh %228 : vector<8x32xf32>
    %230 = arith.mulf %225, %229 : vector<8x32xf32>
    %231 = arith.truncf %230 : vector<8x32xf32> to vector<8x32xbf16>
    %cst_60 = arith.constant dense<0.000000e+00> : vector<8x128xf32>
    %232 = tpu.matmul %231, %1, %cst_60 {dimension_numbers = #tpu.dot_dimension_numbers<[1], [0], [0], [1], [0, 0, 1, 1], [], []>} : vector<8x32xbf16>, vector<32x128xbf16>, vector<8x128xf32> -> vector<8x128xf32>
    %233 = vector.broadcast %6 : vector<1x128xf32> to vector<8x128xf32>
    %234 = arith.addf %232, %233 : vector<8x128xf32>
    %235 = arith.truncf %204 : vector<8x32xf32> to vector<8x32xbf16>
    %cst_61 = arith.constant dense<0.000000e+00> : vector<8x128xf32>
    %236 = tpu.matmul %235, %3, %cst_61 {dimension_numbers = #tpu.dot_dimension_numbers<[1], [0], [0], [1], [0, 0, 1, 1], [], []>} : vector<8x32xbf16>, vector<32x128xbf16>, vector<8x128xf32> -> vector<8x128xf32>
    %237 = arith.addf %234, %236 : vector<8x128xf32>
    %238 = arith.negf %237 : vector<8x128xf32>
    %239 = math.exp %238 : vector<8x128xf32>
    %cst_62 = arith.constant 1.000000e+00 : f32
    %240 = vector.broadcast %cst_62 : f32 to vector<8x128xf32>
    %241 = arith.addf %240, %239 : vector<8x128xf32>
    %242 = arith.divf %240, %241 : vector<8x128xf32>
    %243 = math.tanh %237 : vector<8x128xf32>
    %244 = vector.extract_strided_slice %242 {offsets = [0, 0], sizes = [8, 32], strides = [1, 1]} : vector<8x128xf32> to vector<8x32xf32>
    %245 = vector.extract_strided_slice %242 {offsets = [0, 32], sizes = [8, 32], strides = [1, 1]} : vector<8x128xf32> to vector<8x32xf32>
    %246 = vector.extract_strided_slice %243 {offsets = [0, 64], sizes = [8, 32], strides = [1, 1]} : vector<8x128xf32> to vector<8x32xf32>
    %247 = vector.extract_strided_slice %242 {offsets = [0, 96], sizes = [8, 32], strides = [1, 1]} : vector<8x128xf32> to vector<8x32xf32>
    %248 = arith.mulf %245, %202 : vector<8x32xf32>
    %249 = arith.mulf %244, %246 : vector<8x32xf32>
    %250 = arith.addf %248, %249 : vector<8x32xf32>
    %251 = math.tanh %250 : vector<8x32xf32>
    %252 = arith.mulf %247, %251 : vector<8x32xf32>
    %253 = arith.truncf %252 : vector<8x32xf32> to vector<8x32xbf16>
    %cst_63 = arith.constant dense<0.000000e+00> : vector<8x128xf32>
    %254 = tpu.matmul %253, %4, %cst_63 {dimension_numbers = #tpu.dot_dimension_numbers<[1], [0], [0], [1], [0, 0, 1, 1], [], []>} : vector<8x32xbf16>, vector<32x128xbf16>, vector<8x128xf32> -> vector<8x128xf32>
    %255 = vector.broadcast %7 : vector<1x128xf32> to vector<8x128xf32>
    %256 = arith.addf %254, %255 : vector<8x128xf32>
    %c4 = arith.constant 4 : index
    %c0_64 = arith.constant 0 : index
    %c0_65 = arith.constant 0 : index
    %257 = vector.load %arg4[%c4, %c0_64, %c0_65] : memref<8x8x128xf32, #tpu.memory_space<vmem>>, vector<1x8x128xf32>
    %258 = vector.shape_cast %257 : vector<1x8x128xf32> to vector<8x128xf32>
    %259 = vector.shape_cast %256 : vector<8x128xf32> to vector<1x8x128xf32>
    tpu.vector_store %arg4[%c4, %c0_64, %c0_65], %259 {strides = array<i32>} : memref<8x8x128xf32, #tpu.memory_space<vmem>>, vector<1x8x128xf32>,
    %260 = vector.extract_strided_slice %11 {offsets = [40, 0], sizes = [8, 128], strides = [1, 1]} : vector<64x128xf32> to vector<8x128xf32>
    %261 = arith.truncf %230 : vector<8x32xf32> to vector<8x32xbf16>
    %cst_66 = arith.constant dense<0.000000e+00> : vector<8x128xf32>
    %262 = tpu.matmul %261, %2, %cst_66 {dimension_numbers = #tpu.dot_dimension_numbers<[1], [0], [0], [1], [0, 0, 1, 1], [], []>} : vector<8x32xbf16>, vector<32x128xbf16>, vector<8x128xf32> -> vector<8x128xf32>
    %263 = arith.addf %260, %262 : vector<8x128xf32>
    %264 = arith.negf %263 : vector<8x128xf32>
    %265 = math.exp %264 : vector<8x128xf32>
    %cst_67 = arith.constant 1.000000e+00 : f32
    %266 = vector.broadcast %cst_67 : f32 to vector<8x128xf32>
    %267 = arith.addf %266, %265 : vector<8x128xf32>
    %268 = arith.divf %266, %267 : vector<8x128xf32>
    %269 = math.tanh %263 : vector<8x128xf32>
    %270 = vector.extract_strided_slice %268 {offsets = [0, 0], sizes = [8, 32], strides = [1, 1]} : vector<8x128xf32> to vector<8x32xf32>
    %271 = vector.extract_strided_slice %268 {offsets = [0, 32], sizes = [8, 32], strides = [1, 1]} : vector<8x128xf32> to vector<8x32xf32>
    %272 = vector.extract_strided_slice %269 {offsets = [0, 64], sizes = [8, 32], strides = [1, 1]} : vector<8x128xf32> to vector<8x32xf32>
    %273 = vector.extract_strided_slice %268 {offsets = [0, 96], sizes = [8, 32], strides = [1, 1]} : vector<8x128xf32> to vector<8x32xf32>
    %274 = arith.mulf %271, %228 : vector<8x32xf32>
    %275 = arith.mulf %270, %272 : vector<8x32xf32>
    %276 = arith.addf %274, %275 : vector<8x32xf32>
    %277 = math.tanh %276 : vector<8x32xf32>
    %278 = arith.mulf %273, %277 : vector<8x32xf32>
    %279 = arith.truncf %278 : vector<8x32xf32> to vector<8x32xbf16>
    %cst_68 = arith.constant dense<0.000000e+00> : vector<8x128xf32>
    %280 = tpu.matmul %279, %1, %cst_68 {dimension_numbers = #tpu.dot_dimension_numbers<[1], [0], [0], [1], [0, 0, 1, 1], [], []>} : vector<8x32xbf16>, vector<32x128xbf16>, vector<8x128xf32> -> vector<8x128xf32>
    %281 = vector.broadcast %6 : vector<1x128xf32> to vector<8x128xf32>
    %282 = arith.addf %280, %281 : vector<8x128xf32>
    %283 = arith.truncf %252 : vector<8x32xf32> to vector<8x32xbf16>
    %cst_69 = arith.constant dense<0.000000e+00> : vector<8x128xf32>
    %284 = tpu.matmul %283, %3, %cst_69 {dimension_numbers = #tpu.dot_dimension_numbers<[1], [0], [0], [1], [0, 0, 1, 1], [], []>} : vector<8x32xbf16>, vector<32x128xbf16>, vector<8x128xf32> -> vector<8x128xf32>
    %285 = arith.addf %282, %284 : vector<8x128xf32>
    %286 = arith.negf %285 : vector<8x128xf32>
    %287 = math.exp %286 : vector<8x128xf32>
    %cst_70 = arith.constant 1.000000e+00 : f32
    %288 = vector.broadcast %cst_70 : f32 to vector<8x128xf32>
    %289 = arith.addf %288, %287 : vector<8x128xf32>
    %290 = arith.divf %288, %289 : vector<8x128xf32>
    %291 = math.tanh %285 : vector<8x128xf32>
    %292 = vector.extract_strided_slice %290 {offsets = [0, 0], sizes = [8, 32], strides = [1, 1]} : vector<8x128xf32> to vector<8x32xf32>
    %293 = vector.extract_strided_slice %290 {offsets = [0, 32], sizes = [8, 32], strides = [1, 1]} : vector<8x128xf32> to vector<8x32xf32>
    %294 = vector.extract_strided_slice %291 {offsets = [0, 64], sizes = [8, 32], strides = [1, 1]} : vector<8x128xf32> to vector<8x32xf32>
    %295 = vector.extract_strided_slice %290 {offsets = [0, 96], sizes = [8, 32], strides = [1, 1]} : vector<8x128xf32> to vector<8x32xf32>
    %296 = arith.mulf %293, %250 : vector<8x32xf32>
    %297 = arith.mulf %292, %294 : vector<8x32xf32>
    %298 = arith.addf %296, %297 : vector<8x32xf32>
    %299 = math.tanh %298 : vector<8x32xf32>
    %300 = arith.mulf %295, %299 : vector<8x32xf32>
    %301 = arith.truncf %300 : vector<8x32xf32> to vector<8x32xbf16>
    %cst_71 = arith.constant dense<0.000000e+00> : vector<8x128xf32>
    %302 = tpu.matmul %301, %4, %cst_71 {dimension_numbers = #tpu.dot_dimension_numbers<[1], [0], [0], [1], [0, 0, 1, 1], [], []>} : vector<8x32xbf16>, vector<32x128xbf16>, vector<8x128xf32> -> vector<8x128xf32>
    %303 = vector.broadcast %7 : vector<1x128xf32> to vector<8x128xf32>
    %304 = arith.addf %302, %303 : vector<8x128xf32>
    %c5 = arith.constant 5 : index
    %c0_72 = arith.constant 0 : index
    %c0_73 = arith.constant 0 : index
    %305 = vector.load %arg4[%c5, %c0_72, %c0_73] : memref<8x8x128xf32, #tpu.memory_space<vmem>>, vector<1x8x128xf32>
    %306 = vector.shape_cast %305 : vector<1x8x128xf32> to vector<8x128xf32>
    %307 = vector.shape_cast %304 : vector<8x128xf32> to vector<1x8x128xf32>
    tpu.vector_store %arg4[%c5, %c0_72, %c0_73], %307 {strides = array<i32>} : memref<8x8x128xf32, #tpu.memory_space<vmem>>, vector<1x8x128xf32>,
    %308 = vector.extract_strided_slice %11 {offsets = [48, 0], sizes = [8, 128], strides = [1, 1]} : vector<64x128xf32> to vector<8x128xf32>
    %309 = arith.truncf %278 : vector<8x32xf32> to vector<8x32xbf16>
    %cst_74 = arith.constant dense<0.000000e+00> : vector<8x128xf32>
    %310 = tpu.matmul %309, %2, %cst_74 {dimension_numbers = #tpu.dot_dimension_numbers<[1], [0], [0], [1], [0, 0, 1, 1], [], []>} : vector<8x32xbf16>, vector<32x128xbf16>, vector<8x128xf32> -> vector<8x128xf32>
    %311 = arith.addf %308, %310 : vector<8x128xf32>
    %312 = arith.negf %311 : vector<8x128xf32>
    %313 = math.exp %312 : vector<8x128xf32>
    %cst_75 = arith.constant 1.000000e+00 : f32
    %314 = vector.broadcast %cst_75 : f32 to vector<8x128xf32>
    %315 = arith.addf %314, %313 : vector<8x128xf32>
    %316 = arith.divf %314, %315 : vector<8x128xf32>
    %317 = math.tanh %311 : vector<8x128xf32>
    %318 = vector.extract_strided_slice %316 {offsets = [0, 0], sizes = [8, 32], strides = [1, 1]} : vector<8x128xf32> to vector<8x32xf32>
    %319 = vector.extract_strided_slice %316 {offsets = [0, 32], sizes = [8, 32], strides = [1, 1]} : vector<8x128xf32> to vector<8x32xf32>
    %320 = vector.extract_strided_slice %317 {offsets = [0, 64], sizes = [8, 32], strides = [1, 1]} : vector<8x128xf32> to vector<8x32xf32>
    %321 = vector.extract_strided_slice %316 {offsets = [0, 96], sizes = [8, 32], strides = [1, 1]} : vector<8x128xf32> to vector<8x32xf32>
    %322 = arith.mulf %319, %276 : vector<8x32xf32>
    %323 = arith.mulf %318, %320 : vector<8x32xf32>
    %324 = arith.addf %322, %323 : vector<8x32xf32>
    %325 = math.tanh %324 : vector<8x32xf32>
    %326 = arith.mulf %321, %325 : vector<8x32xf32>
    %327 = arith.truncf %326 : vector<8x32xf32> to vector<8x32xbf16>
    %cst_76 = arith.constant dense<0.000000e+00> : vector<8x128xf32>
    %328 = tpu.matmul %327, %1, %cst_76 {dimension_numbers = #tpu.dot_dimension_numbers<[1], [0], [0], [1], [0, 0, 1, 1], [], []>} : vector<8x32xbf16>, vector<32x128xbf16>, vector<8x128xf32> -> vector<8x128xf32>
    %329 = vector.broadcast %6 : vector<1x128xf32> to vector<8x128xf32>
    %330 = arith.addf %328, %329 : vector<8x128xf32>
    %331 = arith.truncf %300 : vector<8x32xf32> to vector<8x32xbf16>
    %cst_77 = arith.constant dense<0.000000e+00> : vector<8x128xf32>
    %332 = tpu.matmul %331, %3, %cst_77 {dimension_numbers = #tpu.dot_dimension_numbers<[1], [0], [0], [1], [0, 0, 1, 1], [], []>} : vector<8x32xbf16>, vector<32x128xbf16>, vector<8x128xf32> -> vector<8x128xf32>
    %333 = arith.addf %330, %332 : vector<8x128xf32>
    %334 = arith.negf %333 : vector<8x128xf32>
    %335 = math.exp %334 : vector<8x128xf32>
    %cst_78 = arith.constant 1.000000e+00 : f32
    %336 = vector.broadcast %cst_78 : f32 to vector<8x128xf32>
    %337 = arith.addf %336, %335 : vector<8x128xf32>
    %338 = arith.divf %336, %337 : vector<8x128xf32>
    %339 = math.tanh %333 : vector<8x128xf32>
    %340 = vector.extract_strided_slice %338 {offsets = [0, 0], sizes = [8, 32], strides = [1, 1]} : vector<8x128xf32> to vector<8x32xf32>
    %341 = vector.extract_strided_slice %338 {offsets = [0, 32], sizes = [8, 32], strides = [1, 1]} : vector<8x128xf32> to vector<8x32xf32>
    %342 = vector.extract_strided_slice %339 {offsets = [0, 64], sizes = [8, 32], strides = [1, 1]} : vector<8x128xf32> to vector<8x32xf32>
    %343 = vector.extract_strided_slice %338 {offsets = [0, 96], sizes = [8, 32], strides = [1, 1]} : vector<8x128xf32> to vector<8x32xf32>
    %344 = arith.mulf %341, %298 : vector<8x32xf32>
    %345 = arith.mulf %340, %342 : vector<8x32xf32>
    %346 = arith.addf %344, %345 : vector<8x32xf32>
    %347 = math.tanh %346 : vector<8x32xf32>
    %348 = arith.mulf %343, %347 : vector<8x32xf32>
    %349 = arith.truncf %348 : vector<8x32xf32> to vector<8x32xbf16>
    %cst_79 = arith.constant dense<0.000000e+00> : vector<8x128xf32>
    %350 = tpu.matmul %349, %4, %cst_79 {dimension_numbers = #tpu.dot_dimension_numbers<[1], [0], [0], [1], [0, 0, 1, 1], [], []>} : vector<8x32xbf16>, vector<32x128xbf16>, vector<8x128xf32> -> vector<8x128xf32>
    %351 = vector.broadcast %7 : vector<1x128xf32> to vector<8x128xf32>
    %352 = arith.addf %350, %351 : vector<8x128xf32>
    %c6 = arith.constant 6 : index
    %c0_80 = arith.constant 0 : index
    %c0_81 = arith.constant 0 : index
    %353 = vector.load %arg4[%c6, %c0_80, %c0_81] : memref<8x8x128xf32, #tpu.memory_space<vmem>>, vector<1x8x128xf32>
    %354 = vector.shape_cast %353 : vector<1x8x128xf32> to vector<8x128xf32>
    %355 = vector.shape_cast %352 : vector<8x128xf32> to vector<1x8x128xf32>
    tpu.vector_store %arg4[%c6, %c0_80, %c0_81], %355 {strides = array<i32>} : memref<8x8x128xf32, #tpu.memory_space<vmem>>, vector<1x8x128xf32>,
    %356 = vector.extract_strided_slice %11 {offsets = [56, 0], sizes = [8, 128], strides = [1, 1]} : vector<64x128xf32> to vector<8x128xf32>
    %357 = arith.truncf %326 : vector<8x32xf32> to vector<8x32xbf16>
    %cst_82 = arith.constant dense<0.000000e+00> : vector<8x128xf32>
    %358 = tpu.matmul %357, %2, %cst_82 {dimension_numbers = #tpu.dot_dimension_numbers<[1], [0], [0], [1], [0, 0, 1, 1], [], []>} : vector<8x32xbf16>, vector<32x128xbf16>, vector<8x128xf32> -> vector<8x128xf32>
    %359 = arith.addf %356, %358 : vector<8x128xf32>
    %360 = arith.negf %359 : vector<8x128xf32>
    %361 = math.exp %360 : vector<8x128xf32>
    %cst_83 = arith.constant 1.000000e+00 : f32
    %362 = vector.broadcast %cst_83 : f32 to vector<8x128xf32>
    %363 = arith.addf %362, %361 : vector<8x128xf32>
    %364 = arith.divf %362, %363 : vector<8x128xf32>
    %365 = math.tanh %359 : vector<8x128xf32>
    %366 = vector.extract_strided_slice %364 {offsets = [0, 0], sizes = [8, 32], strides = [1, 1]} : vector<8x128xf32> to vector<8x32xf32>
    %367 = vector.extract_strided_slice %364 {offsets = [0, 32], sizes = [8, 32], strides = [1, 1]} : vector<8x128xf32> to vector<8x32xf32>
    %368 = vector.extract_strided_slice %365 {offsets = [0, 64], sizes = [8, 32], strides = [1, 1]} : vector<8x128xf32> to vector<8x32xf32>
    %369 = vector.extract_strided_slice %364 {offsets = [0, 96], sizes = [8, 32], strides = [1, 1]} : vector<8x128xf32> to vector<8x32xf32>
    %370 = arith.mulf %367, %324 : vector<8x32xf32>
    %371 = arith.mulf %366, %368 : vector<8x32xf32>
    %372 = arith.addf %370, %371 : vector<8x32xf32>
    %373 = math.tanh %372 : vector<8x32xf32>
    %374 = arith.mulf %369, %373 : vector<8x32xf32>
    %375 = arith.truncf %374 : vector<8x32xf32> to vector<8x32xbf16>
    %cst_84 = arith.constant dense<0.000000e+00> : vector<8x128xf32>
    %376 = tpu.matmul %375, %1, %cst_84 {dimension_numbers = #tpu.dot_dimension_numbers<[1], [0], [0], [1], [0, 0, 1, 1], [], []>} : vector<8x32xbf16>, vector<32x128xbf16>, vector<8x128xf32> -> vector<8x128xf32>
    %377 = vector.broadcast %6 : vector<1x128xf32> to vector<8x128xf32>
    %378 = arith.addf %376, %377 : vector<8x128xf32>
    %379 = arith.truncf %348 : vector<8x32xf32> to vector<8x32xbf16>
    %cst_85 = arith.constant dense<0.000000e+00> : vector<8x128xf32>
    %380 = tpu.matmul %379, %3, %cst_85 {dimension_numbers = #tpu.dot_dimension_numbers<[1], [0], [0], [1], [0, 0, 1, 1], [], []>} : vector<8x32xbf16>, vector<32x128xbf16>, vector<8x128xf32> -> vector<8x128xf32>
    %381 = arith.addf %378, %380 : vector<8x128xf32>
    %382 = arith.negf %381 : vector<8x128xf32>
    %383 = math.exp %382 : vector<8x128xf32>
    %cst_86 = arith.constant 1.000000e+00 : f32
    %384 = vector.broadcast %cst_86 : f32 to vector<8x128xf32>
    %385 = arith.addf %384, %383 : vector<8x128xf32>
    %386 = arith.divf %384, %385 : vector<8x128xf32>
    %387 = math.tanh %381 : vector<8x128xf32>
    %388 = vector.extract_strided_slice %386 {offsets = [0, 0], sizes = [8, 32], strides = [1, 1]} : vector<8x128xf32> to vector<8x32xf32>
    %389 = vector.extract_strided_slice %386 {offsets = [0, 32], sizes = [8, 32], strides = [1, 1]} : vector<8x128xf32> to vector<8x32xf32>
    %390 = vector.extract_strided_slice %387 {offsets = [0, 64], sizes = [8, 32], strides = [1, 1]} : vector<8x128xf32> to vector<8x32xf32>
    %391 = vector.extract_strided_slice %386 {offsets = [0, 96], sizes = [8, 32], strides = [1, 1]} : vector<8x128xf32> to vector<8x32xf32>
    %392 = arith.mulf %389, %346 : vector<8x32xf32>
    %393 = arith.mulf %388, %390 : vector<8x32xf32>
    %394 = arith.addf %392, %393 : vector<8x32xf32>
    %395 = math.tanh %394 : vector<8x32xf32>
    %396 = arith.mulf %391, %395 : vector<8x32xf32>
    %397 = arith.truncf %396 : vector<8x32xf32> to vector<8x32xbf16>
    %cst_87 = arith.constant dense<0.000000e+00> : vector<8x128xf32>
    %398 = tpu.matmul %397, %4, %cst_87 {dimension_numbers = #tpu.dot_dimension_numbers<[1], [0], [0], [1], [0, 0, 1, 1], [], []>} : vector<8x32xbf16>, vector<32x128xbf16>, vector<8x128xf32> -> vector<8x128xf32>
    %399 = vector.broadcast %7 : vector<1x128xf32> to vector<8x128xf32>
    %400 = arith.addf %398, %399 : vector<8x128xf32>
    %c7 = arith.constant 7 : index
    %c0_88 = arith.constant 0 : index
    %c0_89 = arith.constant 0 : index
    %401 = vector.load %arg4[%c7, %c0_88, %c0_89] : memref<8x8x128xf32, #tpu.memory_space<vmem>>, vector<1x8x128xf32>
    %402 = vector.shape_cast %401 : vector<1x8x128xf32> to vector<8x128xf32>
    %403 = vector.shape_cast %400 : vector<8x128xf32> to vector<1x8x128xf32>
    tpu.vector_store %arg4[%c7, %c0_88, %c0_89], %403 {strides = array<i32>} : memref<8x8x128xf32, #tpu.memory_space<vmem>>, vector<1x8x128xf32>,
    %c0_90 = arith.constant 0 : index
    %c0_91 = arith.constant 0 : index
    %c0_92 = arith.constant 0 : index
    %404 = vector.load %arg5[%c0_90, %c0_91, %c0_92] : memref<4x8x32xf32, #tpu.memory_space<vmem>>, vector<1x8x32xf32>
    %405 = vector.shape_cast %404 : vector<1x8x32xf32> to vector<8x32xf32>
    %406 = vector.shape_cast %374 : vector<8x32xf32> to vector<1x8x32xf32>
    tpu.vector_store %arg5[%c0_90, %c0_91, %c0_92], %406 {strides = array<i32>} : memref<4x8x32xf32, #tpu.memory_space<vmem>>, vector<1x8x32xf32>,
    %c2_93 = arith.constant 2 : index
    %c0_94 = arith.constant 0 : index
    %c0_95 = arith.constant 0 : index
    %407 = vector.load %arg5[%c2_93, %c0_94, %c0_95] : memref<4x8x32xf32, #tpu.memory_space<vmem>>, vector<1x8x32xf32>
    %408 = vector.shape_cast %407 : vector<1x8x32xf32> to vector<8x32xf32>
    %409 = vector.shape_cast %372 : vector<8x32xf32> to vector<1x8x32xf32>
    tpu.vector_store %arg5[%c2_93, %c0_94, %c0_95], %409 {strides = array<i32>} : memref<4x8x32xf32, #tpu.memory_space<vmem>>, vector<1x8x32xf32>,
    %c1_96 = arith.constant 1 : index
    %c0_97 = arith.constant 0 : index
    %c0_98 = arith.constant 0 : index
    %410 = vector.load %arg5[%c1_96, %c0_97, %c0_98] : memref<4x8x32xf32, #tpu.memory_space<vmem>>, vector<1x8x32xf32>
    %411 = vector.shape_cast %410 : vector<1x8x32xf32> to vector<8x32xf32>
    %412 = vector.shape_cast %396 : vector<8x32xf32> to vector<1x8x32xf32>
    tpu.vector_store %arg5[%c1_96, %c0_97, %c0_98], %412 {strides = array<i32>} : memref<4x8x32xf32, #tpu.memory_space<vmem>>, vector<1x8x32xf32>,
    %c3_99 = arith.constant 3 : index
    %c0_100 = arith.constant 0 : index
    %c0_101 = arith.constant 0 : index
    %413 = vector.load %arg5[%c3_99, %c0_100, %c0_101] : memref<4x8x32xf32, #tpu.memory_space<vmem>>, vector<1x8x32xf32>
    %414 = vector.shape_cast %413 : vector<1x8x32xf32> to vector<8x32xf32>
    %415 = vector.shape_cast %394 : vector<8x32xf32> to vector<1x8x32xf32>
    tpu.vector_store %arg5[%c3_99, %c0_100, %c0_101], %415 {strides = array<i32>} : memref<4x8x32xf32, #tpu.memory_space<vmem>>, vector<1x8x32xf32>,
    return
  }
}

</mosaic_0001>

<llo_original>
// kernel: regressor_forward.1
$region0: #{regressor_forward.1}
  #allocation0 [shape = 'u32[]', space=smem, size = 0x4, offset = 0x4, fixed_abs, tag = 'smem constant byte address 0x4 - core index']
  #allocation1 [shape = 'u32[72,128]{1,0:T(1,128)}', space=vmem, size = 0x9000, scoped, tag = 'internal scratch']
  %s0 = inlined_call_operand.vmem [shape: bf16[64,32], index: 0, kind: input, shape index: {}]
  %s1 = inlined_call_operand.vmem [shape: bf16[160,128], index: 1, kind: input, shape index: {}]
  %s2 = inlined_call_operand.vmem [shape: f32[3,128], index: 2, kind: input, shape index: {}]
  %s3 = inlined_call_operand.vmem [shape: f32[4,8,32], index: 3, kind: input, shape index: {}]
  %s4 = inlined_call_operand.vmem [shape: f32[8,8,128], index: 4, kind: output, shape index: {0}]
  %s5 = inlined_call_operand.vmem [shape: f32[4,8,32], index: 5, kind: output, shape index: {1}]
  %6 = xla_tuple %s4, %s5
  %s7 = sld [smem:[#allocation0]]
  $region34: #{regressor_forward.1} parent=0
    _
  %s9 = ssub.s32 1, %s7
  %s10 = scalar_select 0, %s9, %s7
  // Predicated region
  $region2: #{regressor_forward.1} parent=0 // pred_check
    _
  $region3: #{regressor_forward.1} parent=0 // pred_check_branch
    %12 = sbr.rel (0) target = $region5
  $region4: #{regressor_forward.1} parent=0 // pred_region
    _
  $region5: #{regressor_forward.1} parent=0 // pred_fallthru
    _
  // Predicated region
  $region6: #{regressor_forward.1} parent=0 // pred_check
    _
  $region7: #{regressor_forward.1} parent=0 // pred_check_branch
    %14 = sbr.rel (0) target = $region9
  $region8: #{regressor_forward.1} parent=0 // pred_region
    _
  $region9: #{regressor_forward.1} parent=0 // pred_fallthru
    _
  // Predicated region
  $region10: #{regressor_forward.1} parent=0 // pred_check
    _
  $region11: #{regressor_forward.1} parent=0 // pred_check_branch
    %16 = sbr.rel (0) target = $region13
  $region12: #{regressor_forward.1} parent=0 // pred_region
    _
  $region13: #{regressor_forward.1} parent=0 // pred_fallthru
    _
  // Predicated region
  $region14: #{regressor_forward.1} parent=0 // pred_check
    _
  $region15: #{regressor_forward.1} parent=0 // pred_check_branch
    %18 = sbr.rel (0) target = $region17
  $region16: #{regressor_forward.1} parent=0 // pred_region
    _
  $region17: #{regressor_forward.1} parent=0 // pred_fallthru
    _
  %v20 = vld [vmem:[%s1] sm:$0xf]
  %v21 = vld [vmem:[%s1 + $0x4] sm:$0xf]
  %v22 = vld [vmem:[%s1 + $0x8] sm:$0xf]
  %v23 = vld [vmem:[%s1 + $0xc] sm:$0xf]
  %v24 = vld [vmem:[%s1 + $0x20] sm:$0xf]
  %v25 = vld [vmem:[%s1 + $0x24] sm:$0xf]
  %v26 = vld [vmem:[%s1 + $0x28] sm:$0xf]
  %v27 = vld [vmem:[%s1 + $0x2c] sm:$0xf]
  %v28 = vld [vmem:[%s1 + $0x10] sm:$0xf]
  %v29 = vld [vmem:[%s1 + $0x14] sm:$0xf]
  %v30 = vld [vmem:[%s1 + $0x18] sm:$0xf]
  %v31 = vld [vmem:[%s1 + $0x1c] sm:$0xf]
  %v32 = vld [vmem:[%s1 + $0x30] sm:$0xf]
  %v33 = vld [vmem:[%s1 + $0x34] sm:$0xf]
  %v34 = vld [vmem:[%s1 + $0x38] sm:$0xf]
  %v35 = vld [vmem:[%s1 + $0x3c] sm:$0xf]
  %v36 = vld [vmem:[%s1 + $0x40] sm:$0xf]
  %v37 = vld [vmem:[%s1 + $0x44] sm:$0xf]
  %v38 = vld [vmem:[%s1 + $0x48] sm:$0xf]
  %v39 = vld [vmem:[%s1 + $0x4c] sm:$0xf]
  %v40 = vld [vmem:[%s2] sm:$0x1]
  %v41 = vld [vmem:[%s2 + $0x1] sm:$0x1]
  %v42 = vld [vmem:[%s2 + $0x2] sm:$0x1]
  %v43 = vld [vmem:[%s0] sm:$0xf]
  %v44 = vld [vmem:[%s0 + $0x4] sm:$0xf]
  %v45 = vld [vmem:[%s0 + $0x8] sm:$0xf]
  %v46 = vld [vmem:[%s0 + $0xc] sm:$0xf]
  %v47 = vld [vmem:[%s0 + $0x10] sm:$0xf]
  %v48 = vld [vmem:[%s0 + $0x14] sm:$0xf]
  %v49 = vld [vmem:[%s0 + $0x18] sm:$0xf]
  %v50 = vld [vmem:[%s0 + $0x1c] sm:$0xf]
  %v51 = vperm.slane %v40, 0
  %v60 = vunpack.c.l.b16 %v43
  %v61 = vunpack.c.l.b16 %v44
  %v62 = vunpack.c.l.b16 %v45
  %v63 = vunpack.c.l.b16 %v46
  %v64 = vunpack.c.l.b16 %v47
  %v65 = vunpack.c.l.b16 %v48
  %v66 = vunpack.c.l.b16 %v49
  %v67 = vunpack.c.l.b16 %v50
  %v68 = vpack.c.b16 %v61, %v60
  %v69 = vpack.c.b16 %v63, %v62
  %v70 = vpack.c.b16 %v65, %v64
  %v71 = vpack.c.b16 %v67, %v66
  %v76 = vunpack.c.l.b16 %v20
  %v77 = vunpack.c.l.b16 %v21
  %v78 = vunpack.c.l.b16 %v22
  %v79 = vunpack.c.l.b16 %v23
  %v80 = vpack.c.b16 %v77, %v76
  %v81 = vpack.c.b16 %v79, %v78
  %vm84 = vcmask 261120
  %v86 = vsel %vm84, %v68, 0
  %v89 = vsel %vm84, %v69, 0
  %v92 = vsel %vm84, %v70, 0
  %v95 = vsel %vm84, %v71, 0
  %97 = vmatpush.bf16.msra.mxu0 0
  %98 = vmatpush.bf16.msra.mxu0 0
  %99 = vmatpush.bf16.msra.mxu0 0
  %100 = vmatpush.bf16.msra.mxu0 0
  %101 = vmatpush.bf16.msra.mxu0 0
  %102 = vmatpush.bf16.msra.mxu0 0
  %103 = vmatpush.bf16.msra.mxu0 %v81
  %104 = vmatpush.bf16.msra.mxu0 %v80
  %105 = vmatmul.bf16.gmra.mxu0 %v86
  %v106 = vpop.f32.mrf.mxu0
  %v107 = vadd.f32 %v51, %v106
  %v108 = vpop.f32.mrf.mxu0
  %v109 = vadd.f32 %v51, %v108
  %110 = vmatmul.bf16.gmra.mxu0 %v89
  %v111 = vpop.f32.mrf.mxu0
  %v112 = vadd.f32 %v51, %v111
  %v113 = vpop.f32.mrf.mxu0
  %v114 = vadd.f32 %v51, %v113
  %115 = vmatmul.bf16.gmra.mxu0 %v92
  %v116 = vpop.f32.mrf.mxu0
  %v117 = vadd.f32 %v51, %v116
  %v118 = vpop.f32.mrf.mxu0
  %v119 = vadd.f32 %v51, %v118
  %120 = vmatmul.bf16.gmra.mxu0 %v95
  %v121 = vpop.f32.mrf.mxu0
  %v122 = vadd.f32 %v51, %v121
  %v123 = vpop.f32.mrf.mxu0
  %v124 = vadd.f32 %v51, %v123
  %125 = vdwg.mxu0
  %v126 = vld [vmem:[%s3] sm:$0xff]
  %s127 = scalar_lea.vmem %s3, 8
  %v128 = vld [vmem:[%s127] sm:$0xff]
  %s129 = scalar_lea.vmem %s3, 16
  %v130 = vld [vmem:[%s129] sm:$0xff]
  %s131 = scalar_lea.vmem %s3, 24
  %v132 = vld [vmem:[%s131] sm:$0xff]
  %v133 = vpack.c.bf16 %v126, %v126
  %v138 = vunpack.c.l.b16 %v28
  %v139 = vunpack.c.l.b16 %v29
  %v140 = vunpack.c.l.b16 %v30
  %v141 = vunpack.c.l.b16 %v31
  %v142 = vpack.c.b16 %v139, %v138
  %v143 = vpack.c.b16 %v141, %v140
  %v147 = vsel %vm84, %v133, 0
  %149 = vmatpush.bf16.msra.mxu0 0
  %150 = vmatpush.bf16.msra.mxu0 0
  %151 = vmatpush.bf16.msra.mxu0 0
  %152 = vmatpush.bf16.msra.mxu0 0
  %153 = vmatpush.bf16.msra.mxu0 0
  %154 = vmatpush.bf16.msra.mxu0 0
  %155 = vmatpush.bf16.msra.mxu0 %v143
  %156 = vmatpush.bf16.msra.mxu0 %v142
  %157 = vmatmul.bf16.gmra.mxu0 %v147
  %v158 = vpop.f32.mrf.mxu0
  %v159 = vadd.f32 0.0, %v158
  %v160 = vpop.f32.mrf.mxu0
  %161 = vdwg.mxu0
  %v162 = vadd.f32 %v107, %v159
  %v163 = vxor.u32 %v162, 2147483648
  %v164 = vmul.f32 %v163, 1.442695
  %v165 = vpow.pop %v164
  %v166 = vadd.f32 %v165, 1.0
  %v167 = vrcp.pop %v166
  %v168 = vmul.f32 %v166, %v167
  %v169 = vsub.f32 1.0, %v168
  %v170 = vmul.f32 %v167, %v169
  %v171 = vadd.f32 %v167, %v170
  %vm172 = vweird.f32 %v166
  %vm173 = vweird.f32 %v167
  %vm174 = vmor %vm172, %vm173
  %v175 = vsel %vm174, %v167, %v171
  %v176 = vand.u32 2147483647, %v166
  %vm177 = vcmp.eq.f32.partialorder %v176, 8.507059e+37
  %v178 = vand.u32 %v166, 2147483648
  %v179 = vor.u32 1.1754944e-38, %v178
  %v180 = vsel %vm177, %v179, %v175
  %v181 = vmul.f32 1.0, %v180
  %v182 = vtanh.pop %v162
  %184 = vrot.lane.b32.xlu0 %v130, 32
  %v185 = vpop.permute.xlu0 %184
  %v187 = vmul.f32 %v181, %v185
  %189 = vrot.lane.b32.xlu0 %v182, 64
  %v190 = vpop.permute.xlu0 %189
  %v192 = vmul.f32 %v181, %v190
  %194 = vrot.lane.b32.xlu0 %v192, 32
  %v195 = vpop.permute.xlu0 %194
  %v197 = vadd.f32 %v187, %v195
  %v198 = vtanh.pop %v197
  %200 = vrot.lane.b32.xlu0 %v198, 64
  %v201 = vpop.permute.xlu0 %200
  %v203 = vmul.f32 %v181, %v201
  %v204 = vpack.c.bf16 %v203, %v203
  %v205 = vperm.slane %v41, 0
  %207 = vrot.lane.b32.xlu0 %v204, 32
  %v208 = vpop.permute.xlu0 %207
  %v213 = vunpack.c.l.b16 %v24
  %v214 = vunpack.c.l.b16 %v25
  %v215 = vunpack.c.l.b16 %v26
  %v216 = vunpack.c.l.b16 %v27
  %v217 = vpack.c.b16 %v214, %v213
  %v218 = vpack.c.b16 %v216, %v215
  %v222 = vsel %vm84, %v208, 0
  %224 = vmatpush.bf16.msra.mxu0 0
  %225 = vmatpush.bf16.msra.mxu0 0
  %226 = vmatpush.bf16.msra.mxu0 0
  %227 = vmatpush.bf16.msra.mxu0 0
  %228 = vmatpush.bf16.msra.mxu0 0
  %229 = vmatpush.bf16.msra.mxu0 0
  %230 = vmatpush.bf16.msra.mxu0 %v218
  %231 = vmatpush.bf16.msra.mxu0 %v217
  %232 = vmatmul.bf16.gmra.mxu0 %v222
  %v233 = vpop.f32.mrf.mxu0
  %v234 = vadd.f32 %v205, %v233
  %v235 = vpop.f32.mrf.mxu0
  %236 = vdwg.mxu0
  %v237 = vpack.c.bf16 %v128, %v128
  %v242 = vunpack.c.l.b16 %v32
  %v243 = vunpack.c.l.b16 %v33
  %v244 = vunpack.c.l.b16 %v34
  %v245 = vunpack.c.l.b16 %v35
  %v246 = vpack.c.b16 %v243, %v242
  %v247 = vpack.c.b16 %v245, %v244
  %v251 = vsel %vm84, %v237, 0
  %253 = vmatpush.bf16.msra.mxu0 0
  %254 = vmatpush.bf16.msra.mxu0 0
  %255 = vmatpush.bf16.msra.mxu0 0
  %256 = vmatpush.bf16.msra.mxu0 0
  %257 = vmatpush.bf16.msra.mxu0 0
  %258 = vmatpush.bf16.msra.mxu0 0
  %259 = vmatpush.bf16.msra.mxu0 %v247
  %260 = vmatpush.bf16.msra.mxu0 %v246
  %261 = vmatmul.bf16.gmra.mxu0 %v251
  %v262 = vpop.f32.mrf.mxu0
  %v263 = vadd.f32 0.0, %v262
  %v264 = vpop.f32.mrf.mxu0
  %265 = vdwg.mxu0
  %v266 = vadd.f32 %v234, %v263
  %v267 = vxor.u32 %v266, 2147483648
  %v268 = vmul.f32 %v267, 1.442695
  %v269 = vpow.pop %v268
  %v270 = vadd.f32 %v269, 1.0
  %v271 = vrcp.pop %v270
  %v272 = vmul.f32 %v270, %v271
  %v273 = vsub.f32 1.0, %v272
  %v274 = vmul.f32 %v271, %v273
  %v275 = vadd.f32 %v271, %v274
  %vm276 = vweird.f32 %v270
  %vm277 = vweird.f32 %v271
  %vm278 = vmor %vm276, %vm277
  %v279 = vsel %vm278, %v271, %v275
  %v280 = vand.u32 2147483647, %v270
  %vm281 = vcmp.eq.f32.partialorder %v280, 8.507059e+37
  %v282 = vand.u32 %v270, 2147483648
  %v283 = vor.u32 1.1754944e-38, %v282
  %v284 = vsel %vm281, %v283, %v279
  %v285 = vmul.f32 1.0, %v284
  %v286 = vtanh.pop %v266
  %288 = vrot.lane.b32.xlu0 %v132, 32
  %v289 = vpop.permute.xlu0 %288
  %v291 = vmul.f32 %v285, %v289
  %293 = vrot.lane.b32.xlu0 %v286, 64
  %v294 = vpop.permute.xlu0 %293
  %v296 = vmul.f32 %v285, %v294
  %298 = vrot.lane.b32.xlu0 %v296, 32
  %v299 = vpop.permute.xlu0 %298
  %v301 = vadd.f32 %v291, %v299
  %v302 = vtanh.pop %v301
  %304 = vrot.lane.b32.xlu0 %v302, 64
  %v305 = vpop.permute.xlu0 %304
  %v307 = vmul.f32 %v285, %v305
  %v308 = vpack.c.bf16 %v307, %v307
  %v309 = vperm.slane %v42, 0
  %311 = vrot.lane.b32.xlu0 %v308, 32
  %v312 = vpop.permute.xlu0 %311
  %v317 = vunpack.c.l.b16 %v36
  %v318 = vunpack.c.l.b16 %v37
  %v319 = vunpack.c.l.b16 %v38
  %v320 = vunpack.c.l.b16 %v39
  %v321 = vpack.c.b16 %v318, %v317
  %v322 = vpack.c.b16 %v320, %v319
  %v326 = vsel %vm84, %v312, 0
  %328 = vmatpush.bf16.msra.mxu0 0
  %329 = vmatpush.bf16.msra.mxu0 0
  %330 = vmatpush.bf16.msra.mxu0 0
  %331 = vmatpush.bf16.msra.mxu0 0
  %332 = vmatpush.bf16.msra.mxu0 0
  %333 = vmatpush.bf16.msra.mxu0 0
  %334 = vmatpush.bf16.msra.mxu0 %v322
  %335 = vmatpush.bf16.msra.mxu0 %v321
  %336 = vmatmul.bf16.gmra.mxu0 %v326
  %v337 = vpop.f32.mrf.mxu0
  %v338 = vadd.f32 %v309, %v337
  %v339 = vpop.f32.mrf.mxu0
  %340 = vdwg.mxu0
  %341 = vst [vmem:[%s4] sm:$0xff] %v338
  %342 = vmatpush.bf16.msra.mxu0 0
  %343 = vmatpush.bf16.msra.mxu0 0
  %344 = vmatpush.bf16.msra.mxu0 0
  %345 = vmatpush.bf16.msra.mxu0 0
  %346 = vmatpush.bf16.msra.mxu0 0
  %347 = vmatpush.bf16.msra.mxu0 0
  %348 = vmatpush.bf16.msra.mxu0 %v143
  %349 = vmatpush.bf16.msra.mxu0 %v142
  %350 = vmatmul.bf16.gmra.mxu0 %v222
  %v351 = vpop.f32.mrf.mxu0
  %v352 = vadd.f32 0.0, %v351
  %v353 = vpop.f32.mrf.mxu0
  %354 = vdwg.mxu0
  %v355 = vadd.f32 %v109, %v352
  %v356 = vxor.u32 %v355, 2147483648
  %v357 = vmul.f32 %v356, 1.442695
  %v358 = vpow.pop %v357
  %v359 = vadd.f32 %v358, 1.0
  %v360 = vrcp.pop %v359
  %v361 = vmul.f32 %v359, %v360
  %v362 = vsub.f32 1.0, %v361
  %v363 = vmul.f32 %v360, %v362
  %v364 = vadd.f32 %v360, %v363
  %vm365 = vweird.f32 %v359
  %vm366 = vweird.f32 %v360
  %vm367 = vmor %vm365, %vm366
  %v368 = vsel %vm367, %v360, %v364
  %v369 = vand.u32 2147483647, %v359
  %vm370 = vcmp.eq.f32.partialorder %v369, 8.507059e+37
  %v371 = vand.u32 %v359, 2147483648
  %v372 = vor.u32 1.1754944e-38, %v371
  %v373 = vsel %vm370, %v372, %v368
  %v374 = vmul.f32 1.0, %v373
  %v375 = vtanh.pop %v355
  %v376 = vmul.f32 %v374, %v197
  %378 = vrot.lane.b32.xlu0 %v375, 64
  %v379 = vpop.permute.xlu0 %378
  %v381 = vmul.f32 %v374, %v379
  %383 = vrot.lane.b32.xlu0 %v381, 32
  %v384 = vpop.permute.xlu0 %383
  %v386 = vadd.f32 %v376, %v384
  %v387 = vtanh.pop %v386
  %389 = vrot.lane.b32.xlu0 %v387, 64
  %v390 = vpop.permute.xlu0 %389
  %v392 = vmul.f32 %v374, %v390
  %v393 = vpack.c.bf16 %v392, %v392
  %395 = vrot.lane.b32.xlu0 %v393, 32
  %v396 = vpop.permute.xlu0 %395
  %v398 = vsel %vm84, %v396, 0
  %400 = vmatpush.bf16.msra.mxu0 0
  %401 = vmatpush.bf16.msra.mxu0 0
  %402 = vmatpush.bf16.msra.mxu0 0
  %403 = vmatpush.bf16.msra.mxu0 0
  %404 = vmatpush.bf16.msra.mxu0 0
  %405 = vmatpush.bf16.msra.mxu0 0
  %406 = vmatpush.bf16.msra.mxu0 %v218
  %407 = vmatpush.bf16.msra.mxu0 %v217
  %408 = vmatmul.bf16.gmra.mxu0 %v398
  %v409 = vpop.f32.mrf.mxu0
  %v410 = vadd.f32 %v205, %v409
  %v411 = vpop.f32.mrf.mxu0
  %412 = vdwg.mxu0
  %413 = vmatpush.bf16.msra.mxu0 0
  %414 = vmatpush.bf16.msra.mxu0 0
  %415 = vmatpush.bf16.msra.mxu0 0
  %416 = vmatpush.bf16.msra.mxu0 0
  %417 = vmatpush.bf16.msra.mxu0 0
  %418 = vmatpush.bf16.msra.mxu0 0
  %419 = vmatpush.bf16.msra.mxu0 %v247
  %420 = vmatpush.bf16.msra.mxu0 %v246
  %421 = vmatmul.bf16.gmra.mxu0 %v326
  %v422 = vpop.f32.mrf.mxu0
  %v423 = vadd.f32 0.0, %v422
  %v424 = vpop.f32.mrf.mxu0
  %425 = vdwg.mxu0
  %v426 = vadd.f32 %v410, %v423
  %v427 = vxor.u32 %v426, 2147483648
  %v428 = vmul.f32 %v427, 1.442695
  %v429 = vpow.pop %v428
  %v430 = vadd.f32 %v429, 1.0
  %v431 = vrcp.pop %v430
  %v432 = vmul.f32 %v430, %v431
  %v433 = vsub.f32 1.0, %v432
  %v434 = vmul.f32 %v431, %v433
  %v435 = vadd.f32 %v431, %v434
  %vm436 = vweird.f32 %v430
  %vm437 = vweird.f32 %v431
  %vm438 = vmor %vm436, %vm437
  %v439 = vsel %vm438, %v431, %v435
  %v440 = vand.u32 2147483647, %v430
  %vm441 = vcmp.eq.f32.partialorder %v440, 8.507059e+37
  %v442 = vand.u32 %v430, 2147483648
  %v443 = vor.u32 1.1754944e-38, %v442
  %v444 = vsel %vm441, %v443, %v439
  %v445 = vmul.f32 1.0, %v444
  %v446 = vtanh.pop %v426
  %v447 = vmul.f32 %v445, %v301
  %449 = vrot.lane.b32.xlu0 %v446, 64
  %v450 = vpop.permute.xlu0 %449
  %v452 = vmul.f32 %v445, %v450
  %454 = vrot.lane.b32.xlu0 %v452, 32
  %v455 = vpop.permute.xlu0 %454
  %v457 = vadd.f32 %v447, %v455
  %v458 = vtanh.pop %v457
  %460 = vrot.lane.b32.xlu0 %v458, 64
  %v461 = vpop.permute.xlu0 %460
  %v463 = vmul.f32 %v445, %v461
  %v464 = vpack.c.bf16 %v463, %v463
  %466 = vrot.lane.b32.xlu0 %v464, 32
  %v467 = vpop.permute.xlu0 %466
  %v469 = vsel %vm84, %v467, 0
  %471 = vmatpush.bf16.msra.mxu0 0
  %472 = vmatpush.bf16.msra.mxu0 0
  %473 = vmatpush.bf16.msra.mxu0 0
  %474 = vmatpush.bf16.msra.mxu0 0
  %475 = vmatpush.bf16.msra.mxu0 0
  %476 = vmatpush.bf16.msra.mxu0 0
  %477 = vmatpush.bf16.msra.mxu0 %v322
  %478 = vmatpush.bf16.msra.mxu0 %v321
  %479 = vmatmul.bf16.gmra.mxu0 %v469
  %v480 = vpop.f32.mrf.mxu0
  %v481 = vadd.f32 %v309, %v480
  %v482 = vpop.f32.mrf.mxu0
  %483 = vdwg.mxu0
  %s484 = scalar_lea.vmem %s4, 8
  %485 = vst [vmem:[%s484] sm:$0xff] %v481
  %486 = vmatpush.bf16.msra.mxu0 0
  %487 = vmatpush.bf16.msra.mxu0 0
  %488 = vmatpush.bf16.msra.mxu0 0
  %489 = vmatpush.bf16.msra.mxu0 0
  %490 = vmatpush.bf16.msra.mxu0 0
  %491 = vmatpush.bf16.msra.mxu0 0
  %492 = vmatpush.bf16.msra.mxu0 %v143
  %493 = vmatpush.bf16.msra.mxu0 %v142
  %494 = vmatmul.bf16.gmra.mxu0 %v398
  %v495 = vpop.f32.mrf.mxu0
  %v496 = vadd.f32 0.0, %v495
  %v497 = vpop.f32.mrf.mxu0
  %498 = vdwg.mxu0
  %v499 = vadd.f32 %v112, %v496
  %v500 = vxor.u32 %v499, 2147483648
  %v501 = vmul.f32 %v500, 1.442695
  %v502 = vpow.pop %v501
  %v503 = vadd.f32 %v502, 1.0
  %v504 = vrcp.pop %v503
  %v505 = vmul.f32 %v503, %v504
  %v506 = vsub.f32 1.0, %v505
  %v507 = vmul.f32 %v504, %v506
  %v508 = vadd.f32 %v504, %v507
  %vm509 = vweird.f32 %v503
  %vm510 = vweird.f32 %v504
  %vm511 = vmor %vm509, %vm510
  %v512 = vsel %vm511, %v504, %v508
  %v513 = vand.u32 2147483647, %v503
  %vm514 = vcmp.eq.f32.partialorder %v513, 8.507059e+37
  %v515 = vand.u32 %v503, 2147483648
  %v516 = vor.u32 1.1754944e-38, %v515
  %v517 = vsel %vm514, %v516, %v512
  %v518 = vmul.f32 1.0, %v517
  %v519 = vtanh.pop %v499
  %v520 = vmul.f32 %v518, %v386
  %522 = vrot.lane.b32.xlu0 %v519, 64
  %v523 = vpop.permute.xlu0 %522
  %v525 = vmul.f32 %v518, %v523
  %527 = vrot.lane.b32.xlu0 %v525, 32
  %v528 = vpop.permute.xlu0 %527
  %v530 = vadd.f32 %v520, %v528
  %v531 = vtanh.pop %v530
  %533 = vrot.lane.b32.xlu0 %v531, 64
  %v534 = vpop.permute.xlu0 %533
  %v536 = vmul.f32 %v518, %v534
  %v537 = vpack.c.bf16 %v536, %v536
  %539 = vrot.lane.b32.xlu0 %v537, 32
  %v540 = vpop.permute.xlu0 %539
  %v542 = vsel %vm84, %v540, 0
  %544 = vmatpush.bf16.msra.mxu0 0
  %545 = vmatpush.bf16.msra.mxu0 0
  %546 = vmatpush.bf16.msra.mxu0 0
  %547 = vmatpush.bf16.msra.mxu0 0
  %548 = vmatpush.bf16.msra.mxu0 0
  %549 = vmatpush.bf16.msra.mxu0 0
  %550 = vmatpush.bf16.msra.mxu0 %v218
  %551 = vmatpush.bf16.msra.mxu0 %v217
  %552 = vmatmul.bf16.gmra.mxu0 %v542
  %v553 = vpop.f32.mrf.mxu0
  %v554 = vadd.f32 %v205, %v553
  %v555 = vpop.f32.mrf.mxu0
  %556 = vdwg.mxu0
  %557 = vmatpush.bf16.msra.mxu0 0
  %558 = vmatpush.bf16.msra.mxu0 0
  %559 = vmatpush.bf16.msra.mxu0 0
  %560 = vmatpush.bf16.msra.mxu0 0
  %561 = vmatpush.bf16.msra.mxu0 0
  %562 = vmatpush.bf16.msra.mxu0 0
  %563 = vmatpush.bf16.msra.mxu0 %v247
  %564 = vmatpush.bf16.msra.mxu0 %v246
  %565 = vmatmul.bf16.gmra.mxu0 %v469
  %v566 = vpop.f32.mrf.mxu0
  %v567 = vadd.f32 0.0, %v566
  %v568 = vpop.f32.mrf.mxu0
  %569 = vdwg.mxu0
  %v570 = vadd.f32 %v554, %v567
  %v571 = vxor.u32 %v570, 2147483648
  %v572 = vmul.f32 %v571, 1.442695
  %v573 = vpow.pop %v572
  %v574 = vadd.f32 %v573, 1.0
  %v575 = vrcp.pop %v574
  %v576 = vmul.f32 %v574, %v575
  %v577 = vsub.f32 1.0, %v576
  %v578 = vmul.f32 %v575, %v577
  %v579 = vadd.f32 %v575, %v578
  %vm580 = vweird.f32 %v574
  %vm581 = vweird.f32 %v575
  %vm582 = vmor %vm580, %vm581
  %v583 = vsel %vm582, %v575, %v579
  %v584 = vand.u32 2147483647, %v574
  %vm585 = vcmp.eq.f32.partialorder %v584, 8.507059e+37
  %v586 = vand.u32 %v574, 2147483648
  %v587 = vor.u32 1.1754944e-38, %v586
  %v588 = vsel %vm585, %v587, %v583
  %v589 = vmul.f32 1.0, %v588
  %v590 = vtanh.pop %v570
  %v591 = vmul.f32 %v589, %v457
  %593 = vrot.lane.b32.xlu0 %v590, 64
  %v594 = vpop.permute.xlu0 %593
  %v596 = vmul.f32 %v589, %v594
  %598 = vrot.lane.b32.xlu0 %v596, 32
  %v599 = vpop.permute.xlu0 %598
  %v601 = vadd.f32 %v591, %v599
  %v602 = vtanh.pop %v601
  %604 = vrot.lane.b32.xlu0 %v602, 64
  %v605 = vpop.permute.xlu0 %604
  %v607 = vmul.f32 %v589, %v605
  %v608 = vpack.c.bf16 %v607, %v607
  %610 = vrot.lane.b32.xlu0 %v608, 32
  %v611 = vpop.permute.xlu0 %610
  %v613 = vsel %vm84, %v611, 0
  %615 = vmatpush.bf16.msra.mxu0 0
  %616 = vmatpush.bf16.msra.mxu0 0
  %617 = vmatpush.bf16.msra.mxu0 0
  %618 = vmatpush.bf16.msra.mxu0 0
  %619 = vmatpush.bf16.msra.mxu0 0
  %620 = vmatpush.bf16.msra.mxu0 0
  %621 = vmatpush.bf16.msra.mxu0 %v322
  %622 = vmatpush.bf16.msra.mxu0 %v321
  %623 = vmatmul.bf16.gmra.mxu0 %v613
  %v624 = vpop.f32.mrf.mxu0
  %v625 = vadd.f32 %v309, %v624
  %v626 = vpop.f32.mrf.mxu0
  %627 = vdwg.mxu0
  %s628 = scalar_lea.vmem %s4, 16
  %629 = vst [vmem:[%s628] sm:$0xff] %v625
  %630 = vmatpush.bf16.msra.mxu0 0
  %631 = vmatpush.bf16.msra.mxu0 0
  %632 = vmatpush.bf16.msra.mxu0 0
  %633 = vmatpush.bf16.msra.mxu0 0
  %634 = vmatpush.bf16.msra.mxu0 0
  %635 = vmatpush.bf16.msra.mxu0 0
  %636 = vmatpush.bf16.msra.mxu0 %v143
  %637 = vmatpush.bf16.msra.mxu0 %v142
  %638 = vmatmul.bf16.gmra.mxu0 %v542
  %v639 = vpop.f32.mrf.mxu0
  %v640 = vadd.f32 0.0, %v639
  %v641 = vpop.f32.mrf.mxu0
  %642 = vdwg.mxu0
  %v643 = vadd.f32 %v114, %v640
  %v644 = vxor.u32 %v643, 2147483648
  %v645 = vmul.f32 %v644, 1.442695
  %v646 = vpow.pop %v645
  %v647 = vadd.f32 %v646, 1.0
  %v648 = vrcp.pop %v647
  %v649 = vmul.f32 %v647, %v648
  %v650 = vsub.f32 1.0, %v649
  %v651 = vmul.f32 %v648, %v650
  %v652 = vadd.f32 %v648, %v651
  %vm653 = vweird.f32 %v647
  %vm654 = vweird.f32 %v648
  %vm655 = vmor %vm653, %vm654
  %v656 = vsel %vm655, %v648, %v652
  %v657 = vand.u32 2147483647, %v647
  %vm658 = vcmp.eq.f32.partialorder %v657, 8.507059e+37
  %v659 = vand.u32 %v647, 2147483648
  %v660 = vor.u32 1.1754944e-38, %v659
  %v661 = vsel %vm658, %v660, %v656
  %v662 = vmul.f32 1.0, %v661
  %v663 = vtanh.pop %v643
  %v664 = vmul.f32 %v662, %v530
  %666 = vrot.lane.b32.xlu0 %v663, 64
  %v667 = vpop.permute.xlu0 %666
  %v669 = vmul.f32 %v662, %v667
  %671 = vrot.lane.b32.xlu0 %v669, 32
  %v672 = vpop.permute.xlu0 %671
  %v674 = vadd.f32 %v664, %v672
  %v675 = vtanh.pop %v674
  %677 = vrot.lane.b32.xlu0 %v675, 64
  %v678 = vpop.permute.xlu0 %677
  %v680 = vmul.f32 %v662, %v678
  %v681 = vpack.c.bf16 %v680, %v680
  %683 = vrot.lane.b32.xlu0 %v681, 32
  %v684 = vpop.permute.xlu0 %683
  %v686 = vsel %vm84, %v684, 0
  %688 = vmatpush.bf16.msra.mxu0 0
  %689 = vmatpush.bf16.msra.mxu0 0
  %690 = vmatpush.bf16.msra.mxu0 0
  %691 = vmatpush.bf16.msra.mxu0 0
  %692 = vmatpush.bf16.msra.mxu0 0
  %693 = vmatpush.bf16.msra.mxu0 0
  %694 = vmatpush.bf16.msra.mxu0 %v218
  %695 = vmatpush.bf16.msra.mxu0 %v217
  %696 = vmatmul.bf16.gmra.mxu0 %v686
  %v697 = vpop.f32.mrf.mxu0
  %v698 = vadd.f32 %v205, %v697
  %v699 = vpop.f32.mrf.mxu0
  %700 = vdwg.mxu0
  %701 = vmatpush.bf16.msra.mxu0 0
  %702 = vmatpush.bf16.msra.mxu0 0
  %703 = vmatpush.bf16.msra.mxu0 0
  %704 = vmatpush.bf16.msra.mxu0 0
  %705 = vmatpush.bf16.msra.mxu0 0
  %706 = vmatpush.bf16.msra.mxu0 0
  %707 = vmatpush.bf16.msra.mxu0 %v247
  %708 = vmatpush.bf16.msra.mxu0 %v246
  %709 = vmatmul.bf16.gmra.mxu0 %v613
  %v710 = vpop.f32.mrf.mxu0
  %v711 = vadd.f32 0.0, %v710
  %v712 = vpop.f32.mrf.mxu0
  %713 = vdwg.mxu0
  %v714 = vadd.f32 %v698, %v711
  %v715 = vxor.u32 %v714, 2147483648
  %v716 = vmul.f32 %v715, 1.442695
  %v717 = vpow.pop %v716
  %v718 = vadd.f32 %v717, 1.0
  %v719 = vrcp.pop %v718
  %v720 = vmul.f32 %v718, %v719
  %v721 = vsub.f32 1.0, %v720
  %v722 = vmul.f32 %v719, %v721
  %v723 = vadd.f32 %v719, %v722
  %vm724 = vweird.f32 %v718
  %vm725 = vweird.f32 %v719
  %vm726 = vmor %vm724, %vm725
  %v727 = vsel %vm726, %v719, %v723
  %v728 = vand.u32 2147483647, %v718
  %vm729 = vcmp.eq.f32.partialorder %v728, 8.507059e+37
  %v730 = vand.u32 %v718, 2147483648
  %v731 = vor.u32 1.1754944e-38, %v730
  %v732 = vsel %vm729, %v731, %v727
  %v733 = vmul.f32 1.0, %v732
  %v734 = vtanh.pop %v714
  %v735 = vmul.f32 %v733, %v601
  %737 = vrot.lane.b32.xlu0 %v734, 64
  %v738 = vpop.permute.xlu0 %737
  %v740 = vmul.f32 %v733, %v738
  %742 = vrot.lane.b32.xlu0 %v740, 32
  %v743 = vpop.permute.xlu0 %742
  %v745 = vadd.f32 %v735, %v743
  %v746 = vtanh.pop %v745
  %748 = vrot.lane.b32.xlu0 %v746, 64
  %v749 = vpop.permute.xlu0 %748
  %v751 = vmul.f32 %v733, %v749
  %v752 = vpack.c.bf16 %v751, %v751
  %754 = vrot.lane.b32.xlu0 %v752, 32
  %v755 = vpop.permute.xlu0 %754
  %v757 = vsel %vm84, %v755, 0
  %759 = vmatpush.bf16.msra.mxu0 0
  %760 = vmatpush.bf16.msra.mxu0 0
  %761 = vmatpush.bf16.msra.mxu0 0
  %762 = vmatpush.bf16.msra.mxu0 0
  %763 = vmatpush.bf16.msra.mxu0 0
  %764 = vmatpush.bf16.msra.mxu0 0
  %765 = vmatpush.bf16.msra.mxu0 %v322
  %766 = vmatpush.bf16.msra.mxu0 %v321
  %767 = vmatmul.bf16.gmra.mxu0 %v757
  %v768 = vpop.f32.mrf.mxu0
  %v769 = vadd.f32 %v309, %v768
  %v770 = vpop.f32.mrf.mxu0
  %771 = vdwg.mxu0
  %s772 = scalar_lea.vmem %s4, 24
  %773 = vst [vmem:[%s772] sm:$0xff] %v769
  %774 = vmatpush.bf16.msra.mxu0 0
  %775 = vmatpush.bf16.msra.mxu0 0
  %776 = vmatpush.bf16.msra.mxu0 0
  %777 = vmatpush.bf16.msra.mxu0 0
  %778 = vmatpush.bf16.msra.mxu0 0
  %779 = vmatpush.bf16.msra.mxu0 0
  %780 = vmatpush.bf16.msra.mxu0 %v143
  %781 = vmatpush.bf16.msra.mxu0 %v142
  %782 = vmatmul.bf16.gmra.mxu0 %v686
  %v783 = vpop.f32.mrf.mxu0
  %v784 = vadd.f32 0.0, %v783
  %v785 = vpop.f32.mrf.mxu0
  %786 = vdwg.mxu0
  %v787 = vadd.f32 %v117, %v784
  %v788 = vxor.u32 %v787, 2147483648
  %v789 = vmul.f32 %v788, 1.442695
  %v790 = vpow.pop %v789
  %v791 = vadd.f32 %v790, 1.0
  %v792 = vrcp.pop %v791
  %v793 = vmul.f32 %v791, %v792
  %v794 = vsub.f32 1.0, %v793
  %v795 = vmul.f32 %v792, %v794
  %v796 = vadd.f32 %v792, %v795
  %vm797 = vweird.f32 %v791
  %vm798 = vweird.f32 %v792
  %vm799 = vmor %vm797, %vm798
  %v800 = vsel %vm799, %v792, %v796
  %v801 = vand.u32 2147483647, %v791
  %vm802 = vcmp.eq.f32.partialorder %v801, 8.507059e+37
  %v803 = vand.u32 %v791, 2147483648
  %v804 = vor.u32 1.1754944e-38, %v803
  %v805 = vsel %vm802, %v804, %v800
  %v806 = vmul.f32 1.0, %v805
  %v807 = vtanh.pop %v787
  %v808 = vmul.f32 %v806, %v674
  %810 = vrot.lane.b32.xlu0 %v807, 64
  %v811 = vpop.permute.xlu0 %810
  %v813 = vmul.f32 %v806, %v811
  %815 = vrot.lane.b32.xlu0 %v813, 32
  %v816 = vpop.permute.xlu0 %815
  %v818 = vadd.f32 %v808, %v816
  %v819 = vtanh.pop %v818
  %821 = vrot.lane.b32.xlu0 %v819, 64
  %v822 = vpop.permute.xlu0 %821
  %v824 = vmul.f32 %v806, %v822
  %v825 = vpack.c.bf16 %v824, %v824
  %827 = vrot.lane.b32.xlu0 %v825, 32
  %v828 = vpop.permute.xlu0 %827
  %v830 = vsel %vm84, %v828, 0
  %832 = vmatpush.bf16.msra.mxu0 0
  %833 = vmatpush.bf16.msra.mxu0 0
  %834 = vmatpush.bf16.msra.mxu0 0
  %835 = vmatpush.bf16.msra.mxu0 0
  %836 = vmatpush.bf16.msra.mxu0 0
  %837 = vmatpush.bf16.msra.mxu0 0
  %838 = vmatpush.bf16.msra.mxu0 %v218
  %839 = vmatpush.bf16.msra.mxu0 %v217
  %840 = vmatmul.bf16.gmra.mxu0 %v830
  %v841 = vpop.f32.mrf.mxu0
  %v842 = vadd.f32 %v205, %v841
  %v843 = vpop.f32.mrf.mxu0
  %844 = vdwg.mxu0
  %845 = vmatpush.bf16.msra.mxu0 0
  %846 = vmatpush.bf16.msra.mxu0 0
  %847 = vmatpush.bf16.msra.mxu0 0
  %848 = vmatpush.bf16.msra.mxu0 0
  %849 = vmatpush.bf16.msra.mxu0 0
  %850 = vmatpush.bf16.msra.mxu0 0
  %851 = vmatpush.bf16.msra.mxu0 %v247
  %852 = vmatpush.bf16.msra.mxu0 %v246
  %853 = vmatmul.bf16.gmra.mxu0 %v757
  %v854 = vpop.f32.mrf.mxu0
  %v855 = vadd.f32 0.0, %v854
  %v856 = vpop.f32.mrf.mxu0
  %857 = vdwg.mxu0
  %v858 = vadd.f32 %v842, %v855
  %v859 = vxor.u32 %v858, 2147483648
  %v860 = vmul.f32 %v859, 1.442695
  %v861 = vpow.pop %v860
  %v862 = vadd.f32 %v861, 1.0
  %v863 = vrcp.pop %v862
  %v864 = vmul.f32 %v862, %v863
  %v865 = vsub.f32 1.0, %v864
  %v866 = vmul.f32 %v863, %v865
  %v867 = vadd.f32 %v863, %v866
  %vm868 = vweird.f32 %v862
  %vm869 = vweird.f32 %v863
  %vm870 = vmor %vm868, %vm869
  %v871 = vsel %vm870, %v863, %v867
  %v872 = vand.u32 2147483647, %v862
  %vm873 = vcmp.eq.f32.partialorder %v872, 8.507059e+37
  %v874 = vand.u32 %v862, 2147483648
  %v875 = vor.u32 1.1754944e-38, %v874
  %v876 = vsel %vm873, %v875, %v871
  %v877 = vmul.f32 1.0, %v876
  %v878 = vtanh.pop %v858
  %v879 = vmul.f32 %v877, %v745
  %881 = vrot.lane.b32.xlu0 %v878, 64
  %v882 = vpop.permute.xlu0 %881
  %v884 = vmul.f32 %v877, %v882
  %886 = vrot.lane.b32.xlu0 %v884, 32
  %v887 = vpop.permute.xlu0 %886
  %v889 = vadd.f32 %v879, %v887
  %v890 = vtanh.pop %v889
  %892 = vrot.lane.b32.xlu0 %v890, 64
  %v893 = vpop.permute.xlu0 %892
  %v895 = vmul.f32 %v877, %v893
  %v896 = vpack.c.bf16 %v895, %v895
  %898 = vrot.lane.b32.xlu0 %v896, 32
  %v899 = vpop.permute.xlu0 %898
  %v901 = vsel %vm84, %v899, 0
  %903 = vmatpush.bf16.msra.mxu0 0
  %904 = vmatpush.bf16.msra.mxu0 0
  %905 = vmatpush.bf16.msra.mxu0 0
  %906 = vmatpush.bf16.msra.mxu0 0
  %907 = vmatpush.bf16.msra.mxu0 0
  %908 = vmatpush.bf16.msra.mxu0 0
  %909 = vmatpush.bf16.msra.mxu0 %v322
  %910 = vmatpush.bf16.msra.mxu0 %v321
  %911 = vmatmul.bf16.gmra.mxu0 %v901
  %v912 = vpop.f32.mrf.mxu0
  %v913 = vadd.f32 %v309, %v912
  %v914 = vpop.f32.mrf.mxu0
  %915 = vdwg.mxu0
  %s916 = scalar_lea.vmem %s4, 32
  %917 = vst [vmem:[%s916] sm:$0xff] %v913
  %918 = vmatpush.bf16.msra.mxu0 0
  %919 = vmatpush.bf16.msra.mxu0 0
  %920 = vmatpush.bf16.msra.mxu0 0
  %921 = vmatpush.bf16.msra.mxu0 0
  %922 = vmatpush.bf16.msra.mxu0 0
  %923 = vmatpush.bf16.msra.mxu0 0
  %924 = vmatpush.bf16.msra.mxu0 %v143
  %925 = vmatpush.bf16.msra.mxu0 %v142
  %926 = vmatmul.bf16.gmra.mxu0 %v830
  %v927 = vpop.f32.mrf.mxu0
  %v928 = vadd.f32 0.0, %v927
  %v929 = vpop.f32.mrf.mxu0
  %930 = vdwg.mxu0
  %v931 = vadd.f32 %v119, %v928
  %v932 = vxor.u32 %v931, 2147483648
  %v933 = vmul.f32 %v932, 1.442695
  %v934 = vpow.pop %v933
  %v935 = vadd.f32 %v934, 1.0
  %v936 = vrcp.pop %v935
  %v937 = vmul.f32 %v935, %v936
  %v938 = vsub.f32 1.0, %v937
  %v939 = vmul.f32 %v936, %v938
  %v940 = vadd.f32 %v936, %v939
  %vm941 = vweird.f32 %v935
  %vm942 = vweird.f32 %v936
  %vm943 = vmor %vm941, %vm942
  %v944 = vsel %vm943, %v936, %v940
  %v945 = vand.u32 2147483647, %v935
  %vm946 = vcmp.eq.f32.partialorder %v945, 8.507059e+37
  %v947 = vand.u32 %v935, 2147483648
  %v948 = vor.u32 1.1754944e-38, %v947
  %v949 = vsel %vm946, %v948, %v944
  %v950 = vmul.f32 1.0, %v949
  %v951 = vtanh.pop %v931
  %v952 = vmul.f32 %v950, %v818
  %954 = vrot.lane.b32.xlu0 %v951, 64
  %v955 = vpop.permute.xlu0 %954
  %v957 = vmul.f32 %v950, %v955
  %959 = vrot.lane.b32.xlu0 %v957, 32
  %v960 = vpop.permute.xlu0 %959
  %v962 = vadd.f32 %v952, %v960
  %v963 = vtanh.pop %v962
  %965 = vrot.lane.b32.xlu0 %v963, 64
  %v966 = vpop.permute.xlu0 %965
  %v968 = vmul.f32 %v950, %v966
  %v969 = vpack.c.bf16 %v968, %v968
  %971 = vrot.lane.b32.xlu0 %v969, 32
  %v972 = vpop.permute.xlu0 %971
  %v974 = vsel %vm84, %v972, 0
  %976 = vmatpush.bf16.msra.mxu0 0
  %977 = vmatpush.bf16.msra.mxu0 0
  %978 = vmatpush.bf16.msra.mxu0 0
  %979 = vmatpush.bf16.msra.mxu0 0
  %980 = vmatpush.bf16.msra.mxu0 0
  %981 = vmatpush.bf16.msra.mxu0 0
  %982 = vmatpush.bf16.msra.mxu0 %v218
  %983 = vmatpush.bf16.msra.mxu0 %v217
  %984 = vmatmul.bf16.gmra.mxu0 %v974
  %v985 = vpop.f32.mrf.mxu0
  %v986 = vadd.f32 %v205, %v985
  %v987 = vpop.f32.mrf.mxu0
  %988 = vdwg.mxu0
  %989 = vmatpush.bf16.msra.mxu0 0
  %990 = vmatpush.bf16.msra.mxu0 0
  %991 = vmatpush.bf16.msra.mxu0 0
  %992 = vmatpush.bf16.msra.mxu0 0
  %993 = vmatpush.bf16.msra.mxu0 0
  %994 = vmatpush.bf16.msra.mxu0 0
  %995 = vmatpush.bf16.msra.mxu0 %v247
  %996 = vmatpush.bf16.msra.mxu0 %v246
  %997 = vmatmul.bf16.gmra.mxu0 %v901
  %v998 = vpop.f32.mrf.mxu0
  %v999 = vadd.f32 0.0, %v998
  %v1000 = vpop.f32.mrf.mxu0
  %1001 = vdwg.mxu0
  %v1002 = vadd.f32 %v986, %v999
  %v1003 = vxor.u32 %v1002, 2147483648
  %v1004 = vmul.f32 %v1003, 1.442695
  %v1005 = vpow.pop %v1004
  %v1006 = vadd.f32 %v1005, 1.0
  %v1007 = vrcp.pop %v1006
  %v1008 = vmul.f32 %v1006, %v1007
  %v1009 = vsub.f32 1.0, %v1008
  %v1010 = vmul.f32 %v1007, %v1009
  %v1011 = vadd.f32 %v1007, %v1010
  %vm1012 = vweird.f32 %v1006
  %vm1013 = vweird.f32 %v1007
  %vm1014 = vmor %vm1012, %vm1013
  %v1015 = vsel %vm1014, %v1007, %v1011
  %v1016 = vand.u32 2147483647, %v1006
  %vm1017 = vcmp.eq.f32.partialorder %v1016, 8.507059e+37
  %v1018 = vand.u32 %v1006, 2147483648
  %v1019 = vor.u32 1.1754944e-38, %v1018
  %v1020 = vsel %vm1017, %v1019, %v1015
  %v1021 = vmul.f32 1.0, %v1020
  %v1022 = vtanh.pop %v1002
  %v1023 = vmul.f32 %v1021, %v889
  %1025 = vrot.lane.b32.xlu0 %v1022, 64
  %v1026 = vpop.permute.xlu0 %1025
  %v1028 = vmul.f32 %v1021, %v1026
  %1030 = vrot.lane.b32.xlu0 %v1028, 32
  %v1031 = vpop.permute.xlu0 %1030
  %v1033 = vadd.f32 %v1023, %v1031
  %v1034 = vtanh.pop %v1033
  %1036 = vrot.lane.b32.xlu0 %v1034, 64
  %v1037 = vpop.permute.xlu0 %1036
  %v1039 = vmul.f32 %v1021, %v1037
  %v1040 = vpack.c.bf16 %v1039, %v1039
  %1042 = vrot.lane.b32.xlu0 %v1040, 32
  %v1043 = vpop.permute.xlu0 %1042
  %v1045 = vsel %vm84, %v1043, 0
  %1047 = vmatpush.bf16.msra.mxu0 0
  %1048 = vmatpush.bf16.msra.mxu0 0
  %1049 = vmatpush.bf16.msra.mxu0 0
  %1050 = vmatpush.bf16.msra.mxu0 0
  %1051 = vmatpush.bf16.msra.mxu0 0
  %1052 = vmatpush.bf16.msra.mxu0 0
  %1053 = vmatpush.bf16.msra.mxu0 %v322
  %1054 = vmatpush.bf16.msra.mxu0 %v321
  %1055 = vmatmul.bf16.gmra.mxu0 %v1045
  %v1056 = vpop.f32.mrf.mxu0
  %v1057 = vadd.f32 %v309, %v1056
  %v1058 = vpop.f32.mrf.mxu0
  %1059 = vdwg.mxu0
  %s1060 = scalar_lea.vmem %s4, 40
  %1061 = vst [vmem:[%s1060] sm:$0xff] %v1057
  %1062 = vmatpush.bf16.msra.mxu0 0
  %1063 = vmatpush.bf16.msra.mxu0 0
  %1064 = vmatpush.bf16.msra.mxu0 0
  %1065 = vmatpush.bf16.msra.mxu0 0
  %1066 = vmatpush.bf16.msra.mxu0 0
  %1067 = vmatpush.bf16.msra.mxu0 0
  %1068 = vmatpush.bf16.msra.mxu0 %v143
  %1069 = vmatpush.bf16.msra.mxu0 %v142
  %1070 = vmatmul.bf16.gmra.mxu0 %v974
  %v1071 = vpop.f32.mrf.mxu0
  %v1072 = vadd.f32 0.0, %v1071
  %v1073 = vpop.f32.mrf.mxu0
  %1074 = vdwg.mxu0
  %v1075 = vadd.f32 %v122, %v1072
  %v1076 = vxor.u32 %v1075, 2147483648
  %v1077 = vmul.f32 %v1076, 1.442695
  %v1078 = vpow.pop %v1077
  %v1079 = vadd.f32 %v1078, 1.0
  %v1080 = vrcp.pop %v1079
  %v1081 = vmul.f32 %v1079, %v1080
  %v1082 = vsub.f32 1.0, %v1081
  %v1083 = vmul.f32 %v1080, %v1082
  %v1084 = vadd.f32 %v1080, %v1083
  %vm1085 = vweird.f32 %v1079
  %vm1086 = vweird.f32 %v1080
  %vm1087 = vmor %vm1085, %vm1086
  %v1088 = vsel %vm1087, %v1080, %v1084
  %v1089 = vand.u32 2147483647, %v1079
  %vm1090 = vcmp.eq.f32.partialorder %v1089, 8.507059e+37
  %v1091 = vand.u32 %v1079, 2147483648
  %v1092 = vor.u32 1.1754944e-38, %v1091
  %v1093 = vsel %vm1090, %v1092, %v1088
  %v1094 = vmul.f32 1.0, %v1093
  %v1095 = vtanh.pop %v1075
  %v1096 = vmul.f32 %v1094, %v962
  %1098 = vrot.lane.b32.xlu0 %v1095, 64
  %v1099 = vpop.permute.xlu0 %1098
  %v1101 = vmul.f32 %v1094, %v1099
  %1103 = vrot.lane.b32.xlu0 %v1101, 32
  %v1104 = vpop.permute.xlu0 %1103
  %v1106 = vadd.f32 %v1096, %v1104
  %v1107 = vtanh.pop %v1106
  %1109 = vrot.lane.b32.xlu0 %v1107, 64
  %v1110 = vpop.permute.xlu0 %1109
  %v1112 = vmul.f32 %v1094, %v1110
  %v1113 = vpack.c.bf16 %v1112, %v1112
  %1115 = vrot.lane.b32.xlu0 %v1113, 32
  %v1116 = vpop.permute.xlu0 %1115
  %v1118 = vsel %vm84, %v1116, 0
  %1120 = vmatpush.bf16.msra.mxu0 0
  %1121 = vmatpush.bf16.msra.mxu0 0
  %1122 = vmatpush.bf16.msra.mxu0 0
  %1123 = vmatpush.bf16.msra.mxu0 0
  %1124 = vmatpush.bf16.msra.mxu0 0
  %1125 = vmatpush.bf16.msra.mxu0 0
  %1126 = vmatpush.bf16.msra.mxu0 %v218
  %1127 = vmatpush.bf16.msra.mxu0 %v217
  %1128 = vmatmul.bf16.gmra.mxu0 %v1118
  %v1129 = vpop.f32.mrf.mxu0
  %v1130 = vadd.f32 %v205, %v1129
  %v1131 = vpop.f32.mrf.mxu0
  %1132 = vdwg.mxu0
  %1133 = vmatpush.bf16.msra.mxu0 0
  %1134 = vmatpush.bf16.msra.mxu0 0
  %1135 = vmatpush.bf16.msra.mxu0 0
  %1136 = vmatpush.bf16.msra.mxu0 0
  %1137 = vmatpush.bf16.msra.mxu0 0
  %1138 = vmatpush.bf16.msra.mxu0 0
  %1139 = vmatpush.bf16.msra.mxu0 %v247
  %1140 = vmatpush.bf16.msra.mxu0 %v246
  %1141 = vmatmul.bf16.gmra.mxu0 %v1045
  %v1142 = vpop.f32.mrf.mxu0
  %v1143 = vadd.f32 0.0, %v1142
  %v1144 = vpop.f32.mrf.mxu0
  %1145 = vdwg.mxu0
  %v1146 = vadd.f32 %v1130, %v1143
  %v1147 = vxor.u32 %v1146, 2147483648
  %v1148 = vmul.f32 %v1147, 1.442695
  %v1149 = vpow.pop %v1148
  %v1150 = vadd.f32 %v1149, 1.0
  %v1151 = vrcp.pop %v1150
  %v1152 = vmul.f32 %v1150, %v1151
  %v1153 = vsub.f32 1.0, %v1152
  %v1154 = vmul.f32 %v1151, %v1153
  %v1155 = vadd.f32 %v1151, %v1154
  %vm1156 = vweird.f32 %v1150
  %vm1157 = vweird.f32 %v1151
  %vm1158 = vmor %vm1156, %vm1157
  %v1159 = vsel %vm1158, %v1151, %v1155
  %v1160 = vand.u32 2147483647, %v1150
  %vm1161 = vcmp.eq.f32.partialorder %v1160, 8.507059e+37
  %v1162 = vand.u32 %v1150, 2147483648
  %v1163 = vor.u32 1.1754944e-38, %v1162
  %v1164 = vsel %vm1161, %v1163, %v1159
  %v1165 = vmul.f32 1.0, %v1164
  %v1166 = vtanh.pop %v1146
  %v1167 = vmul.f32 %v1165, %v1033
  %1169 = vrot.lane.b32.xlu0 %v1166, 64
  %v1170 = vpop.permute.xlu0 %1169
  %v1172 = vmul.f32 %v1165, %v1170
  %1174 = vrot.lane.b32.xlu0 %v1172, 32
  %v1175 = vpop.permute.xlu0 %1174
  %v1177 = vadd.f32 %v1167, %v1175
  %v1178 = vtanh.pop %v1177
  %1180 = vrot.lane.b32.xlu0 %v1178, 64
  %v1181 = vpop.permute.xlu0 %1180
  %v1183 = vmul.f32 %v1165, %v1181
  %v1184 = vpack.c.bf16 %v1183, %v1183
  %1186 = vrot.lane.b32.xlu0 %v1184, 32
  %v1187 = vpop.permute.xlu0 %1186
  %v1189 = vsel %vm84, %v1187, 0
  %1191 = vmatpush.bf16.msra.mxu0 0
  %1192 = vmatpush.bf16.msra.mxu0 0
  %1193 = vmatpush.bf16.msra.mxu0 0
  %1194 = vmatpush.bf16.msra.mxu0 0
  %1195 = vmatpush.bf16.msra.mxu0 0
  %1196 = vmatpush.bf16.msra.mxu0 0
  %1197 = vmatpush.bf16.msra.mxu0 %v322
  %1198 = vmatpush.bf16.msra.mxu0 %v321
  %1199 = vmatmul.bf16.gmra.mxu0 %v1189
  %v1200 = vpop.f32.mrf.mxu0
  %v1201 = vadd.f32 %v309, %v1200
  %v1202 = vpop.f32.mrf.mxu0
  %1203 = vdwg.mxu0
  %s1204 = scalar_lea.vmem %s4, 48
  %1205 = vst [vmem:[%s1204] sm:$0xff] %v1201
  %1206 = vmatpush.bf16.msra.mxu0 0
  %1207 = vmatpush.bf16.msra.mxu0 0
  %1208 = vmatpush.bf16.msra.mxu0 0
  %1209 = vmatpush.bf16.msra.mxu0 0
  %1210 = vmatpush.bf16.msra.mxu0 0
  %1211 = vmatpush.bf16.msra.mxu0 0
  %1212 = vmatpush.bf16.msra.mxu0 %v143
  %1213 = vmatpush.bf16.msra.mxu0 %v142
  %1214 = vmatmul.bf16.gmra.mxu0 %v1118
  %v1215 = vpop.f32.mrf.mxu0
  %v1216 = vadd.f32 0.0, %v1215
  %v1217 = vpop.f32.mrf.mxu0
  %1218 = vdwg.mxu0
  %v1219 = vadd.f32 %v124, %v1216
  %v1220 = vxor.u32 %v1219, 2147483648
  %v1221 = vmul.f32 %v1220, 1.442695
  %v1222 = vpow.pop %v1221
  %v1223 = vadd.f32 %v1222, 1.0
  %v1224 = vrcp.pop %v1223
  %v1225 = vmul.f32 %v1223, %v1224
  %v1226 = vsub.f32 1.0, %v1225
  %v1227 = vmul.f32 %v1224, %v1226
  %v1228 = vadd.f32 %v1224, %v1227
  %vm1229 = vweird.f32 %v1223
  %vm1230 = vweird.f32 %v1224
  %vm1231 = vmor %vm1229, %vm1230
  %v1232 = vsel %vm1231, %v1224, %v1228
  %v1233 = vand.u32 2147483647, %v1223
  %vm1234 = vcmp.eq.f32.partialorder %v1233, 8.507059e+37
  %v1235 = vand.u32 %v1223, 2147483648
  %v1236 = vor.u32 1.1754944e-38, %v1235
  %v1237 = vsel %vm1234, %v1236, %v1232
  %v1238 = vmul.f32 1.0, %v1237
  %v1239 = vtanh.pop %v1219
  %v1240 = vmul.f32 %v1238, %v1106
  %1242 = vrot.lane.b32.xlu0 %v1239, 64
  %v1243 = vpop.permute.xlu0 %1242
  %v1245 = vmul.f32 %v1238, %v1243
  %1247 = vrot.lane.b32.xlu0 %v1245, 32
  %v1248 = vpop.permute.xlu0 %1247
  %v1250 = vadd.f32 %v1240, %v1248
  %v1251 = vtanh.pop %v1250
  %1253 = vrot.lane.b32.xlu0 %v1251, 64
  %v1254 = vpop.permute.xlu0 %1253
  %v1256 = vmul.f32 %v1238, %v1254
  %v1257 = vpack.c.bf16 %v1256, %v1256
  %1259 = vrot.lane.b32.xlu0 %v1257, 32
  %v1260 = vpop.permute.xlu0 %1259
  %v1262 = vsel %vm84, %v1260, 0
  %1264 = vmatpush.bf16.msra.mxu0 0
  %1265 = vmatpush.bf16.msra.mxu0 0
  %1266 = vmatpush.bf16.msra.mxu0 0
  %1267 = vmatpush.bf16.msra.mxu0 0
  %1268 = vmatpush.bf16.msra.mxu0 0
  %1269 = vmatpush.bf16.msra.mxu0 0
  %1270 = vmatpush.bf16.msra.mxu0 %v218
  %1271 = vmatpush.bf16.msra.mxu0 %v217
  %1272 = vmatmul.bf16.gmra.mxu0 %v1262
  %v1273 = vpop.f32.mrf.mxu0
  %v1274 = vadd.f32 %v205, %v1273
  %v1275 = vpop.f32.mrf.mxu0
  %1276 = vdwg.mxu0
  %1277 = vmatpush.bf16.msra.mxu0 0
  %1278 = vmatpush.bf16.msra.mxu0 0
  %1279 = vmatpush.bf16.msra.mxu0 0
  %1280 = vmatpush.bf16.msra.mxu0 0
  %1281 = vmatpush.bf16.msra.mxu0 0
  %1282 = vmatpush.bf16.msra.mxu0 0
  %1283 = vmatpush.bf16.msra.mxu0 %v247
  %1284 = vmatpush.bf16.msra.mxu0 %v246
  %1285 = vmatmul.bf16.gmra.mxu0 %v1189
  %v1286 = vpop.f32.mrf.mxu0
  %v1287 = vadd.f32 0.0, %v1286
  %v1288 = vpop.f32.mrf.mxu0
  %1289 = vdwg.mxu0
  %v1290 = vadd.f32 %v1274, %v1287
  %v1291 = vxor.u32 %v1290, 2147483648
  %v1292 = vmul.f32 %v1291, 1.442695
  %v1293 = vpow.pop %v1292
  %v1294 = vadd.f32 %v1293, 1.0
  %v1295 = vrcp.pop %v1294
  %v1296 = vmul.f32 %v1294, %v1295
  %v1297 = vsub.f32 1.0, %v1296
  %v1298 = vmul.f32 %v1295, %v1297
  %v1299 = vadd.f32 %v1295, %v1298
  %vm1300 = vweird.f32 %v1294
  %vm1301 = vweird.f32 %v1295
  %vm1302 = vmor %vm1300, %vm1301
  %v1303 = vsel %vm1302, %v1295, %v1299
  %v1304 = vand.u32 2147483647, %v1294
  %vm1305 = vcmp.eq.f32.partialorder %v1304, 8.507059e+37
  %v1306 = vand.u32 %v1294, 2147483648
  %v1307 = vor.u32 1.1754944e-38, %v1306
  %v1308 = vsel %vm1305, %v1307, %v1303
  %v1309 = vmul.f32 1.0, %v1308
  %v1310 = vtanh.pop %v1290
  %v1311 = vmul.f32 %v1309, %v1177
  %1313 = vrot.lane.b32.xlu0 %v1310, 64
  %v1314 = vpop.permute.xlu0 %1313
  %v1316 = vmul.f32 %v1309, %v1314
  %1318 = vrot.lane.b32.xlu0 %v1316, 32
  %v1319 = vpop.permute.xlu0 %1318
  %v1321 = vadd.f32 %v1311, %v1319
  %v1322 = vtanh.pop %v1321
  %1324 = vrot.lane.b32.xlu0 %v1322, 64
  %v1325 = vpop.permute.xlu0 %1324
  %v1327 = vmul.f32 %v1309, %v1325
  %v1328 = vpack.c.bf16 %v1327, %v1327
  %1330 = vrot.lane.b32.xlu0 %v1328, 32
  %v1331 = vpop.permute.xlu0 %1330
  %v1333 = vsel %vm84, %v1331, 0
  %1335 = vmatpush.bf16.msra.mxu0 0
  %1336 = vmatpush.bf16.msra.mxu0 0
  %1337 = vmatpush.bf16.msra.mxu0 0
  %1338 = vmatpush.bf16.msra.mxu0 0
  %1339 = vmatpush.bf16.msra.mxu0 0
  %1340 = vmatpush.bf16.msra.mxu0 0
  %1341 = vmatpush.bf16.msra.mxu0 %v322
  %1342 = vmatpush.bf16.msra.mxu0 %v321
  %1343 = vmatmul.bf16.gmra.mxu0 %v1333
  %v1344 = vpop.f32.mrf.mxu0
  %v1345 = vadd.f32 %v309, %v1344
  %v1346 = vpop.f32.mrf.mxu0
  %1347 = vdwg.mxu0
  %s1348 = scalar_lea.vmem %s4, 56
  %1349 = vst [vmem:[%s1348] sm:$0xff] %v1345
  %1351 = vrot.lane.b32.xlu0 %v1256, 32
  %v1352 = vpop.permute.xlu0 %1351
  %1354 = vst.msk [vmem:[%s5] sm:$0xff] %vm84, %v1352
  %1356 = vrot.lane.b32.xlu0 %v1250, 96
  %v1357 = vpop.permute.xlu0 %1356
  %s1359 = scalar_lea.vmem %s5, 16
  %1360 = vst.msk [vmem:[%s1359] sm:$0xff] %vm84, %v1357
  %1362 = vrot.lane.b32.xlu0 %v1327, 32
  %v1363 = vpop.permute.xlu0 %1362
  %s1365 = scalar_lea.vmem %s5, 8
  %1366 = vst.msk [vmem:[%s1365] sm:$0xff] %vm84, %v1363
  %1368 = vrot.lane.b32.xlu0 %v1321, 96
  %v1369 = vpop.permute.xlu0 %1368
  %s1371 = scalar_lea.vmem %s5, 24
  %1372 = vst.msk [vmem:[%s1371] sm:$0xff] %vm84, %v1369
  // Predicated region
  $region18: #{regressor_forward.1} parent=0 // pred_check
    _
  $region19: #{regressor_forward.1} parent=0 // pred_check_branch
    %1374 = sbr.rel (0) target = $region21
  $region20: #{regressor_forward.1} parent=0 // pred_region
    _
  $region21: #{regressor_forward.1} parent=0 // pred_fallthru
    _
  // Predicated region
  $region22: #{regressor_forward.1} parent=0 // pred_check
    _
  $region23: #{regressor_forward.1} parent=0 // pred_check_branch
    %1376 = sbr.rel (0) target = $region25
  $region24: #{regressor_forward.1} parent=0 // pred_region
    _
  $region25: #{regressor_forward.1} parent=0 // pred_fallthru
    _
  // Predicated region
  $region26: #{regressor_forward.1} parent=0 // pred_check
    _
  $region27: #{regressor_forward.1} parent=0 // pred_check_branch
    %1378 = sbr.rel (0) target = $region29
  $region28: #{regressor_forward.1} parent=0 // pred_region
    _
  $region29: #{regressor_forward.1} parent=0 // pred_fallthru
    _
  // Predicated region
  $region30: #{regressor_forward.1} parent=0 // pred_check
    _
  $region31: #{regressor_forward.1} parent=0 // pred_check_branch
    %1380 = sbr.rel (0) target = $region33
  $region32: #{regressor_forward.1} parent=0 // pred_region
    _
  $region33: #{regressor_forward.1} parent=0 // pred_fallthru
    _

</llo_original>
